<compile_context>
chip_gen: v5e
topology: v5e:2x2
jax: 0.10.0
libtpu: 0.0.40
codegen_flags: <defaults>
</compile_context>

<pallas_src>
import jax
import jax.numpy as jnp
from jax.experimental import pallas as pl
from jax.experimental.pallas import tpu as pltpu


def _abs_kernel(x_ref, o_ref):
    # Elementwise |x| on the whole VMEM tile (single VPU sign-bit clear per vreg).
    o_ref[...] = jnp.abs(x_ref[...])


def _round_up(a: int, b: int) -> int:
    return ((a + b - 1) // b) * b


def _chip_profile():
    """(target_tile_bytes, vmem_limit_bytes_or_None, tensorcores_per_chip)."""
    try:
        kind = jax.devices()[0].device_kind.lower()
    except Exception:
        kind = ""
    if "7x" in kind or "v7" in kind:
        # v7x: 64 MiB VMEM / 2 TCs -> 4 MiB tiles (16 MiB live, fits default limit).
        return 4 << 20, None, 2
    if "v6" in kind or "trillium" in kind:
        # v6e: 128 MiB VMEM -> 8 MiB tiles, but 4x8 MiB needs a raised scoped limit.
        return 8 << 20, 64 << 20, 1
    if "v5" in kind:
        # v5e: 16 MiB default scoped VMEM -> keep 2 MiB tiles (4x2 = 8 MiB live).
        return 2 << 20, None, 1
    # Unknown / older chip: conservative.
    return 2 << 20, None, 1


def modulus(x: jax.Array, *, small_bypass_bytes: int = 1 << 20) -> jax.Array:
    """Elementwise |x|, matching torch.abs semantics (same shape & dtype for real x)."""
    if x.ndim == 0 or x.size == 0:
        return jnp.abs(x)
    if jnp.issubdtype(x.dtype, jnp.complexfloating):
        # TODO(synk): Pallas TPU has no complex dtype; magnitude would need separate
        # real/imag planes + a sqrt path. Fall back to XLA (matches torch.abs output).
        return jnp.abs(x)

    dtype = x.dtype
    itemsize = dtype.itemsize
    total = x.size

    # Tiny tensors: custom-call dispatch dwarfs the memory traffic; let XLA fuse it.
    if total * itemsize < small_bypass_bytes:
        return jnp.abs(x)

    tile_bytes, vmem_limit, cores = _chip_profile()

    # Merge LEADING axes only (minor dim unchanged -> no relayout copy in the HLO).
    if x.ndim == 1:
        x2d = x[None, :]
    else:
        x2d = x.reshape(total // x.shape[-1], x.shape[-1])
    rows, last = x2d.shape

    sub = max(8, 32 // itemsize)                  # sublane packing: 8 (f32) / 16 (bf16) / 32 (i8)
    lane_padded = _round_up(last, 128)
    row_footprint = lane_padded * itemsize        # VMEM bytes of one block row

    if row_footprint <= tile_bytes:
        # Common case: full-extent minor dim (always a legal block extent),
        # tile over the merged leading rows.
        tile_w = last
        tile_rows = tile_bytes // row_footprint
        if tile_rows >= rows:
            tile_rows = rows                      # full-extent block: always legal
        else:
            tile_rows = max(sub, (tile_rows // sub) * sub)
        # v7x: make sure a small grid splits evenly across both TensorCores.
        if cores > 1 and rows >= cores * sub:
            nblk = pl.cdiv(rows, tile_rows)
            if nblk < 8 and nblk % cores != 0:
                target = _round_up(nblk, cores)
                tile_rows = min(rows, max(sub, _round_up(pl.cdiv(rows, target), sub)))
    else:
        # One row alone exceeds the tile budget (huge minor dim / long 1-D inputs):
        # also tile the lane axis in 128-aligned chunks (Pallas masks the tail).
        tile_rows = rows if rows <= sub else sub
        tile_w = max(128, (tile_bytes // (tile_rows * itemsize) // 128) * 128)

    grid = (pl.cdiv(rows, tile_rows), pl.cdiv(last, tile_w))

    cp_kwargs = dict(dimension_semantics=("parallel", "parallel"))
    if vmem_limit is not None:
        cp_kwargs["vmem_limit_bytes"] = vmem_limit

    out2d = pl.pallas_call(
        _abs_kernel,
        out_shape=jax.ShapeDtypeStruct((rows, last), dtype),
        grid=grid,
        in_specs=[pl.BlockSpec((tile_rows, tile_w), lambda i, j: (i, j))],
        out_specs=pl.BlockSpec((tile_rows, tile_w), lambda i, j: (i, j)),
        compiler_params=pltpu.CompilerParams(**cp_kwargs),
        cost_estimate=pl.CostEstimate(
            flops=total, transcendentals=0, bytes_accessed=2 * total * itemsize),
    )(x2d)

    # Leading-axes-only reshape back (minor dim unchanged -> no relayout).
    return out2d.reshape(x.shape)


if __name__ == "__main__":
    key = jax.random.PRNGKey(0)
    k0, k1, k2 = jax.random.split(key, 3)

    # 1) Module-spec shape (tiny NCHW activation): exercises the small-input bypass.
    x_small = jax.random.normal(k0, (2, 4, 16, 16), dtype=jnp.float32)
    y_small = modulus(x_small)
    jax.block_until_ready(y_small)
    assert y_small.shape == x_small.shape and y_small.dtype == x_small.dtype
    assert jnp.array_equal(y_small, jnp.abs(x_small)), "mismatch (bypass path)"

    # 2) Lane-aligned activation slab: goes through the Pallas kernel (free reshape path).
    x_big = jax.random.normal(k1, (8, 16, 64, 128), dtype=jnp.float32)   # 4 MiB
    y_big = modulus(x_big)
    jax.block_until_ready(y_big)
    assert y_big.shape == x_big.shape and y_big.dtype == x_big.dtype
    assert jnp.array_equal(y_big, jnp.abs(x_big)), "mismatch (aligned Pallas path)"

    # 3) Non-128-multiple minor dim: full-extent last-dim block with masked tail,
    #    no padding / slicing round trips.
    x_odd = jax.random.normal(k2, (4, 32, 60, 60), dtype=jnp.float32)    # ~1.8 MiB
    y_odd = modulus(x_odd)
    jax.block_until_ready(y_odd)
    assert jnp.array_equal(y_odd, jnp.abs(x_odd)), "mismatch (unaligned Pallas path)"

    print("KERNEL_OK")
</pallas_src>

<mosaic_0001>
module attributes {stable_mosaic.version = 11 : i64} {
  func.func @_abs_kernel(%arg0: i32, %arg1: i32, %arg2: memref<4096x128xf32, #tpu.memory_space<vmem>>, %arg3: memref<4096x128xf32, #tpu.memory_space<vmem>>) attributes {dimension_semantics = [#tpu.dimension_semantics<parallel>, #tpu.dimension_semantics<parallel>], iteration_bounds = array<i64: 2, 1>, scalar_prefetch = 0 : i64, scratch_operands = 0 : i64, tpu.core_type = #tpu.core_type<tc>, window_params = [{transform_indices = @transform_0, window_bounds = array<i64: 4096, 128>}, {transform_indices = @transform_1, window_bounds = array<i64: 4096, 128>}]} {
    %c0 = arith.constant 0 : index
    %c0_0 = arith.constant 0 : index
    %0 = vector.load %arg2[%c0, %c0_0] : memref<4096x128xf32, #tpu.memory_space<vmem>>, vector<4096x128xf32>
    %1 = math.absf %0 : vector<4096x128xf32>
    %c0_1 = arith.constant 0 : index
    %c0_2 = arith.constant 0 : index
    %2 = vector.load %arg3[%c0_1, %c0_2] : memref<4096x128xf32, #tpu.memory_space<vmem>>, vector<4096x128xf32>
    tpu.vector_store %arg3[%c0_1, %c0_2], %1 {strides = array<i32>} : memref<4096x128xf32, #tpu.memory_space<vmem>>, vector<4096x128xf32>,
    return
  }
  func.func @transform_0(%arg0: i32, %arg1: i32) -> (i32, i32) {
    %c0_i32 = arith.constant 0 : i32
    return %arg0, %arg1 : i32, i32
  }
  func.func @transform_1(%arg0: i32, %arg1: i32) -> (i32, i32) {
    %c0_i32 = arith.constant 0 : i32
    return %arg0, %arg1 : i32, i32
  }
}

</mosaic_0001>

<llo_original>
// kernel: tpu_custom_call.1
$region0: #{tpu_custom_call.1}
  #allocation0 [shape = 'u32[]', space=smem, size = 0x4, offset = 0x4, fixed_abs, tag = 'smem constant byte address 0x4 - core index']
  #allocation1 [shape = 'u32[72,128]{1,0:T(1,128)}', space=vmem, size = 0x9000, scoped, tag = 'internal scratch']
  %s0 = inlined_call_operand.hbm [shape: f32[8192,128], index: 0, kind: input, shape index: {}]
  %s1 = inlined_call_operand.hbm [shape: f32[8192,128], index: 1, kind: output, shape index: {}]
  %s2 = sld [smem:[#allocation0]]
  $region41: #{tpu_custom_call.1} parent=0
    _
  %s4 = ssub.s32 1, %s2
  %s5 = scalar_select 0, %s4, %s2
  $region1: #{tpu_custom_call.1} parent=0
    #allocation2 [shape = 'u8[4194304]{0}', space=vmem, size = 0x400000, scoped, tag = 'input window, operand 0']
    #allocation3 [shape = 's32[2]{0}', space=sflag, size = 0x8, scoped, tag = 'scoped memory for tpu_custom_call.1']
    #allocation4 [shape = 's32[2]{0}', space=sflag, size = 0x8, scoped, tag = 'scoped memory for tpu_custom_call.1']
    #allocation5 [shape = 'u8[4194304]{0}', space=vmem, size = 0x400000, scoped, tag = 'output window, operand 0']
    %6 = vsyncpa [#allocation3], 0
    %s7 = scalar_lea.sflag [#allocation3], 1
    %8 = vsyncpa %s7, 0
    %9 = vsyncpa [#allocation4], 0
    %s10 = scalar_lea.sflag [#allocation4], 1
    %11 = vsyncpa %s10, 0
    loop: start=0, step=1, limit=4
    $region2: #{tpu_custom_call.1} parent=1 // loop_pre_header
      _
    $region3: #{tpu_custom_call.1} parent=1 // loop_header
      %s13 = sphi 0, %s17
      %p14 = scmp.ge.s32.totalorder %s13, 4
      %s20 = sphi 0, %s32
      %s21 = sphi 0, %s28
      %s22 = sphi 0, %s20
      %s23 = sphi 0, %s21
      %s24 = sphi 0, %s22
      %s25 = sphi 0, %s23
      %s37 = sphi 0, %s39
      %s40 = sphi 0, %s37
      %s41 = sphi 0, %s40
      %s57 = sphi 0, %s41
      %s65 = sphi 0, %s67
      %s68 = sphi 0, %s65
      %s69 = sphi 0, %s68
      %s85 = sphi 0, %s69
    $region4: #{tpu_custom_call.1} parent=1 // loop_header_branch
      %16 = sbr.rel (%p14) target = $region8
    $region5: #{tpu_custom_call.1} parent=1 // loop_body
      %s18 = ssub.s32 %s13, 1
      %s19 = ssub.s32 %s13, 2
      %s26 = sadd.s32 1, %s21
      %p27 = scmp.ge.s32.totalorder %s26, 1
      %s28 = scalar_select %p27, 0, %s26
      %s29 = sadd.s32 1, %s20
      %s30 = scalar_select %p27, %s29, %s20
      %p31 = scmp.ge.s32.totalorder %s30, 2
      %s32 = scalar_select %p31, 0, %s30
      %s33 = ssub.s32 %s20, %s32
      %s34 = ssub.s32 %s21, %s28
      %s35 = sor.u32 %s33, %s34
      %p36 = scmp.eq.s32.totalorder %s35, 0
      %s38 = sadd.s32 %s37, 1
      %s39 = scalar_select %p36, %s37, %s38
      %p42 = pneg %p36
      %p43 = scmp.eq.s32.totalorder %s13, 1
      %p44 = por %p42, %p43
      %p45 = scmp.ne.s32.totalorder %s37, %s40
      %p46 = scmp.eq.s32.totalorder %s13, 0
      %p47 = por %p45, %p46
      %p48 = scmp.ne.s32.totalorder %s37, %s40
      %p49 = scmp.eq.s32.totalorder %s18, 1
      %p50 = por %p48, %p49
      %p51 = scmp.ne.s32.totalorder %s40, %s41
      %p52 = scmp.eq.s32.totalorder %s18, 0
      %p53 = por %p51, %p52
      %p54 = scmp.ne.s32.totalorder %s40, %s41
      %p55 = scmp.eq.s32.totalorder %s19, 1
      %p56 = por %p54, %p55
      %p58 = scmp.ne.s32.totalorder %s41, %s57
      %p59 = scmp.eq.s32.totalorder %s19, 0
      %p60 = por %p58, %p59
      %s61 = ssub.s32 %s20, %s32
      %s62 = ssub.s32 %s21, %s28
      %s63 = sor.u32 %s61, %s62
      %p64 = scmp.eq.s32.totalorder %s63, 0
      %s66 = sadd.s32 %s65, 1
      %s67 = scalar_select %p64, %s65, %s66
      %p70 = pneg %p64
      %p71 = scmp.eq.s32.totalorder %s13, 1
      %p72 = por %p70, %p71
      %p73 = scmp.ne.s32.totalorder %s65, %s68
      %p74 = scmp.eq.s32.totalorder %s13, 0
      %p75 = por %p73, %p74
      %p76 = scmp.ne.s32.totalorder %s65, %s68
      %p77 = scmp.eq.s32.totalorder %s18, 1
      %p78 = por %p76, %p77
      %p79 = scmp.ne.s32.totalorder %s68, %s69
      %p80 = scmp.eq.s32.totalorder %s18, 0
      %p81 = por %p79, %p80
      %p82 = scmp.ne.s32.totalorder %s68, %s69
      %p83 = scmp.eq.s32.totalorder %s19, 1
      %p84 = por %p82, %p83
      %p86 = scmp.ne.s32.totalorder %s69, %s85
      %p87 = scmp.eq.s32.totalorder %s19, 0
      %p88 = por %p86, %p87
      %p89 = scmp.le.s32.totalorder 1, %s13
      %p90 = scmp.lt.s32.totalorder %s13, 3
      %p91 = pnand %p89, %p90
      %p92 = pneg %p91
      // Predicated region
      $region9: #{tpu_custom_call.1} parent=5 // pred_check
        _
      $region10: #{tpu_custom_call.1} parent=5 // pred_check_branch
        %94 = sbr.rel (%p91) target = $region12
      $region11: #{tpu_custom_call.1} parent=5 // pred_region
        %s95 = ssub.s32 %s13, 1
      $region12: #{tpu_custom_call.1} parent=5 // pred_fallthru
        _
      %p96 = scmp.lt.s32.totalorder %s13, 2
      // Predicated region
      $region13: #{tpu_custom_call.1} parent=5 // pred_check
        %p97 = pneg %p96
      $region14: #{tpu_custom_call.1} parent=5 // pred_check_branch
        %99 = sbr.rel (%p97) target = $region16
      $region15: #{tpu_custom_call.1} parent=5 // pred_region
        // Predicated region
        $region17: #{tpu_custom_call.1} parent=15 // pred_check
          %p100 = pneg %p47
        $region18: #{tpu_custom_call.1} parent=15 // pred_check_branch
          %102 = sbr.rel (%p100) target = $region20
        $region19: #{tpu_custom_call.1} parent=15 // pred_region
          %s103 = sand.u32 %s37, 1
          %s104 = scalar_lea.sflag [#allocation3], %s103
          %s105 = sand.u32 %s37, 1
          %s106 = smul.addr %s105, 4096
          %s107 = scalar_lea.vmem [#allocation2], %s106
          %s108 = smul.u32 512, %s20
          %110 = vsyncadd %s104, 0
          %s111 = sadd.s32 %s21, %s108
          %s112 = smul.addr %s111, 8
          %s113 = scalar_lea.hbm %s0, %s112
          %s114 = sshll.u32 %s113, 4
          %s115 = int_to_ptr.hbm [resolvable:$true] %s114
          %s116 = sshll.u32 %s107, 4
          %s117 = int_to_ptr.vmem [resolvable:$true] %s116
          %122 = dma.hbm_to_vmem [thread:$0]  %s115, 65536, %s117, %s104, 128, 128, 8
        $region20: #{tpu_custom_call.1} parent=15 // pred_fallthru
          _
      $region16: #{tpu_custom_call.1} parent=5 // pred_fallthru
        _
      %p123 = scmp.le.s32.totalorder 1, %s13
      %p124 = scmp.lt.s32.totalorder %s13, 3
      %p125 = pnand %p123, %p124
      %p126 = pneg %p125
      // Predicated region
      $region21: #{tpu_custom_call.1} parent=5 // pred_check
        _
      $region22: #{tpu_custom_call.1} parent=5 // pred_check_branch
        %128 = sbr.rel (%p125) target = $region24
      $region23: #{tpu_custom_call.1} parent=5 // pred_region
        %s129 = ssub.s32 %s13, 1
        %s130 = sand.u32 %s40, 1
        %s131 = scalar_lea.sflag [#allocation3], %s130
        %s132 = sand.u32 %s40, 1
        %s133 = smul.addr %s132, 4096
        %s134 = scalar_lea.vmem [#allocation2], %s133
        // Predicated region
        $region25: #{tpu_custom_call.1} parent=23 // pred_check
          %p135 = pneg %p53
        $region26: #{tpu_custom_call.1} parent=23 // pred_check_branch
          %137 = sbr.rel (%p135) target = $region28
        $region27: #{tpu_custom_call.1} parent=23 // pred_region
          %139 = dma.done %s131, 65536
        $region28: #{tpu_custom_call.1} parent=23 // pred_fallthru
          _
        %s140 = sand.u32 %s40, 1
        %s141 = scalar_lea.sflag [#allocation3], %s140
        %s142 = sand.u32 %s40, 1
        %s143 = smul.addr %s142, 4096
        %s144 = scalar_lea.vmem [#allocation2], %s143
        %p145 = pneg %p53
        %p146 = pneg %p50
        %p147 = pneg %p81
        %p148 = pneg %p78
        %s149 = sand.u32 %s68, 1
        %s150 = scalar_lea.sflag [#allocation4], %s149
        %s151 = sand.u32 %s68, 1
        %s152 = smul.addr %s151, 4096
        %s153 = scalar_lea.vmem [#allocation5], %s152
        %s154 = smul.u32 512, %s22
        %s155 = smul.u32 512, %s22
        %v156 = vld [vmem:[%s134] sm:$0xff]
        %v157 = vld [vmem:[%s134 + $0x8] sm:$0xff]
        %v158 = vld [vmem:[%s134 + $0x10] sm:$0xff]
        %v159 = vld [vmem:[%s134 + $0x18] sm:$0xff]
        %v160 = vld [vmem:[%s134 + $0x20] sm:$0xff]
        %v161 = vld [vmem:[%s134 + $0x28] sm:$0xff]
        %v162 = vld [vmem:[%s134 + $0x30] sm:$0xff]
        %v163 = vld [vmem:[%s134 + $0x38] sm:$0xff]
        %v164 = vld [vmem:[%s134 + $0x40] sm:$0xff]
        %v165 = vld [vmem:[%s134 + $0x48] sm:$0xff]
        %v166 = vld [vmem:[%s134 + $0x50] sm:$0xff]
        %v167 = vld [vmem:[%s134 + $0x58] sm:$0xff]
        %v168 = vld [vmem:[%s134 + $0x60] sm:$0xff]
        %v169 = vld [vmem:[%s134 + $0x68] sm:$0xff]
        %v170 = vld [vmem:[%s134 + $0x70] sm:$0xff]
        %v171 = vld [vmem:[%s134 + $0x78] sm:$0xff]
        %v172 = vld [vmem:[%s134 + $0x80] sm:$0xff]
        %v173 = vld [vmem:[%s134 + $0x88] sm:$0xff]
        %v174 = vld [vmem:[%s134 + $0x90] sm:$0xff]
        %v175 = vld [vmem:[%s134 + $0x98] sm:$0xff]
        %v176 = vld [vmem:[%s134 + $0xa0] sm:$0xff]
        %v177 = vld [vmem:[%s134 + $0xa8] sm:$0xff]
        %v178 = vld [vmem:[%s134 + $0xb0] sm:$0xff]
        %v179 = vld [vmem:[%s134 + $0xb8] sm:$0xff]
        %v180 = vld [vmem:[%s134 + $0xc0] sm:$0xff]
        %v181 = vld [vmem:[%s134 + $0xc8] sm:$0xff]
        %v182 = vld [vmem:[%s134 + $0xd0] sm:$0xff]
        %v183 = vld [vmem:[%s134 + $0xd8] sm:$0xff]
        %v184 = vld [vmem:[%s134 + $0xe0] sm:$0xff]
        %v185 = vld [vmem:[%s134 + $0xe8] sm:$0xff]
        %v186 = vld [vmem:[%s134 + $0xf0] sm:$0xff]
        %v187 = vld [vmem:[%s134 + $0xf8] sm:$0xff]
        %v188 = vld [vmem:[%s134 + $0x100] sm:$0xff]
        %v189 = vld [vmem:[%s134 + $0x108] sm:$0xff]
        %v190 = vld [vmem:[%s134 + $0x110] sm:$0xff]
        %v191 = vld [vmem:[%s134 + $0x118] sm:$0xff]
        %v192 = vld [vmem:[%s134 + $0x120] sm:$0xff]
        %v193 = vld [vmem:[%s134 + $0x128] sm:$0xff]
        %v194 = vld [vmem:[%s134 + $0x130] sm:$0xff]
        %v195 = vld [vmem:[%s134 + $0x138] sm:$0xff]
        %v196 = vld [vmem:[%s134 + $0x140] sm:$0xff]
        %v197 = vld [vmem:[%s134 + $0x148] sm:$0xff]
        %v198 = vld [vmem:[%s134 + $0x150] sm:$0xff]
        %v199 = vld [vmem:[%s134 + $0x158] sm:$0xff]
        %v200 = vld [vmem:[%s134 + $0x160] sm:$0xff]
        %v201 = vld [vmem:[%s134 + $0x168] sm:$0xff]
        %v202 = vld [vmem:[%s134 + $0x170] sm:$0xff]
        %v203 = vld [vmem:[%s134 + $0x178] sm:$0xff]
        %v204 = vld [vmem:[%s134 + $0x180] sm:$0xff]
        %v205 = vld [vmem:[%s134 + $0x188] sm:$0xff]
        %v206 = vld [vmem:[%s134 + $0x190] sm:$0xff]
        %v207 = vld [vmem:[%s134 + $0x198] sm:$0xff]
        %v208 = vld [vmem:[%s134 + $0x1a0] sm:$0xff]
        %v209 = vld [vmem:[%s134 + $0x1a8] sm:$0xff]
        %v210 = vld [vmem:[%s134 + $0x1b0] sm:$0xff]
        %v211 = vld [vmem:[%s134 + $0x1b8] sm:$0xff]
        %v212 = vld [vmem:[%s134 + $0x1c0] sm:$0xff]
        %v213 = vld [vmem:[%s134 + $0x1c8] sm:$0xff]
        %v214 = vld [vmem:[%s134 + $0x1d0] sm:$0xff]
        %v215 = vld [vmem:[%s134 + $0x1d8] sm:$0xff]
        %v216 = vld [vmem:[%s134 + $0x1e0] sm:$0xff]
        %v217 = vld [vmem:[%s134 + $0x1e8] sm:$0xff]
        %v218 = vld [vmem:[%s134 + $0x1f0] sm:$0xff]
        %v219 = vld [vmem:[%s134 + $0x1f8] sm:$0xff]
        %v220 = vld [vmem:[%s134 + $0x200] sm:$0xff]
        %v221 = vld [vmem:[%s134 + $0x208] sm:$0xff]
        %v222 = vld [vmem:[%s134 + $0x210] sm:$0xff]
        %v223 = vld [vmem:[%s134 + $0x218] sm:$0xff]
        %v224 = vld [vmem:[%s134 + $0x220] sm:$0xff]
        %v225 = vld [vmem:[%s134 + $0x228] sm:$0xff]
        %v226 = vld [vmem:[%s134 + $0x230] sm:$0xff]
        %v227 = vld [vmem:[%s134 + $0x238] sm:$0xff]
        %v228 = vld [vmem:[%s134 + $0x240] sm:$0xff]
        %v229 = vld [vmem:[%s134 + $0x248] sm:$0xff]
        %v230 = vld [vmem:[%s134 + $0x250] sm:$0xff]
        %v231 = vld [vmem:[%s134 + $0x258] sm:$0xff]
        %v232 = vld [vmem:[%s134 + $0x260] sm:$0xff]
        %v233 = vld [vmem:[%s134 + $0x268] sm:$0xff]
        %v234 = vld [vmem:[%s134 + $0x270] sm:$0xff]
        %v235 = vld [vmem:[%s134 + $0x278] sm:$0xff]
        %v236 = vld [vmem:[%s134 + $0x280] sm:$0xff]
        %v237 = vld [vmem:[%s134 + $0x288] sm:$0xff]
        %v238 = vld [vmem:[%s134 + $0x290] sm:$0xff]
        %v239 = vld [vmem:[%s134 + $0x298] sm:$0xff]
        %v240 = vld [vmem:[%s134 + $0x2a0] sm:$0xff]
        %v241 = vld [vmem:[%s134 + $0x2a8] sm:$0xff]
        %v242 = vld [vmem:[%s134 + $0x2b0] sm:$0xff]
        %v243 = vld [vmem:[%s134 + $0x2b8] sm:$0xff]
        %v244 = vld [vmem:[%s134 + $0x2c0] sm:$0xff]
        %v245 = vld [vmem:[%s134 + $0x2c8] sm:$0xff]
        %v246 = vld [vmem:[%s134 + $0x2d0] sm:$0xff]
        %v247 = vld [vmem:[%s134 + $0x2d8] sm:$0xff]
        %v248 = vld [vmem:[%s134 + $0x2e0] sm:$0xff]
        %v249 = vld [vmem:[%s134 + $0x2e8] sm:$0xff]
        %v250 = vld [vmem:[%s134 + $0x2f0] sm:$0xff]
        %v251 = vld [vmem:[%s134 + $0x2f8] sm:$0xff]
        %v252 = vld [vmem:[%s134 + $0x300] sm:$0xff]
        %v253 = vld [vmem:[%s134 + $0x308] sm:$0xff]
        %v254 = vld [vmem:[%s134 + $0x310] sm:$0xff]
        %v255 = vld [vmem:[%s134 + $0x318] sm:$0xff]
        %v256 = vld [vmem:[%s134 + $0x320] sm:$0xff]
        %v257 = vld [vmem:[%s134 + $0x328] sm:$0xff]
        %v258 = vld [vmem:[%s134 + $0x330] sm:$0xff]
        %v259 = vld [vmem:[%s134 + $0x338] sm:$0xff]
        %v260 = vld [vmem:[%s134 + $0x340] sm:$0xff]
        %v261 = vld [vmem:[%s134 + $0x348] sm:$0xff]
        %v262 = vld [vmem:[%s134 + $0x350] sm:$0xff]
        %v263 = vld [vmem:[%s134 + $0x358] sm:$0xff]
        %v264 = vld [vmem:[%s134 + $0x360] sm:$0xff]
        %v265 = vld [vmem:[%s134 + $0x368] sm:$0xff]
        %v266 = vld [vmem:[%s134 + $0x370] sm:$0xff]
        %v267 = vld [vmem:[%s134 + $0x378] sm:$0xff]
        %v268 = vld [vmem:[%s134 + $0x380] sm:$0xff]
        %v269 = vld [vmem:[%s134 + $0x388] sm:$0xff]
        %v270 = vld [vmem:[%s134 + $0x390] sm:$0xff]
        %v271 = vld [vmem:[%s134 + $0x398] sm:$0xff]
        %v272 = vld [vmem:[%s134 + $0x3a0] sm:$0xff]
        %v273 = vld [vmem:[%s134 + $0x3a8] sm:$0xff]
        %v274 = vld [vmem:[%s134 + $0x3b0] sm:$0xff]
        %v275 = vld [vmem:[%s134 + $0x3b8] sm:$0xff]
        %v276 = vld [vmem:[%s134 + $0x3c0] sm:$0xff]
        %v277 = vld [vmem:[%s134 + $0x3c8] sm:$0xff]
        %v278 = vld [vmem:[%s134 + $0x3d0] sm:$0xff]
        %v279 = vld [vmem:[%s134 + $0x3d8] sm:$0xff]
        %v280 = vld [vmem:[%s134 + $0x3e0] sm:$0xff]
        %v281 = vld [vmem:[%s134 + $0x3e8] sm:$0xff]
        %v282 = vld [vmem:[%s134 + $0x3f0] sm:$0xff]
        %v283 = vld [vmem:[%s134 + $0x3f8] sm:$0xff]
        %v284 = vld [vmem:[%s134 + $0x400] sm:$0xff]
        %v285 = vld [vmem:[%s134 + $0x408] sm:$0xff]
        %v286 = vld [vmem:[%s134 + $0x410] sm:$0xff]
        %v287 = vld [vmem:[%s134 + $0x418] sm:$0xff]
        %v288 = vld [vmem:[%s134 + $0x420] sm:$0xff]
        %v289 = vld [vmem:[%s134 + $0x428] sm:$0xff]
        %v290 = vld [vmem:[%s134 + $0x430] sm:$0xff]
        %v291 = vld [vmem:[%s134 + $0x438] sm:$0xff]
        %v292 = vld [vmem:[%s134 + $0x440] sm:$0xff]
        %v293 = vld [vmem:[%s134 + $0x448] sm:$0xff]
        %v294 = vld [vmem:[%s134 + $0x450] sm:$0xff]
        %v295 = vld [vmem:[%s134 + $0x458] sm:$0xff]
        %v296 = vld [vmem:[%s134 + $0x460] sm:$0xff]
        %v297 = vld [vmem:[%s134 + $0x468] sm:$0xff]
        %v298 = vld [vmem:[%s134 + $0x470] sm:$0xff]
        %v299 = vld [vmem:[%s134 + $0x478] sm:$0xff]
        %v300 = vld [vmem:[%s134 + $0x480] sm:$0xff]
        %v301 = vld [vmem:[%s134 + $0x488] sm:$0xff]
        %v302 = vld [vmem:[%s134 + $0x490] sm:$0xff]
        %v303 = vld [vmem:[%s134 + $0x498] sm:$0xff]
        %v304 = vld [vmem:[%s134 + $0x4a0] sm:$0xff]
        %v305 = vld [vmem:[%s134 + $0x4a8] sm:$0xff]
        %v306 = vld [vmem:[%s134 + $0x4b0] sm:$0xff]
        %v307 = vld [vmem:[%s134 + $0x4b8] sm:$0xff]
        %v308 = vld [vmem:[%s134 + $0x4c0] sm:$0xff]
        %v309 = vld [vmem:[%s134 + $0x4c8] sm:$0xff]
        %v310 = vld [vmem:[%s134 + $0x4d0] sm:$0xff]
        %v311 = vld [vmem:[%s134 + $0x4d8] sm:$0xff]
        %v312 = vld [vmem:[%s134 + $0x4e0] sm:$0xff]
        %v313 = vld [vmem:[%s134 + $0x4e8] sm:$0xff]
        %v314 = vld [vmem:[%s134 + $0x4f0] sm:$0xff]
        %v315 = vld [vmem:[%s134 + $0x4f8] sm:$0xff]
        %v316 = vld [vmem:[%s134 + $0x500] sm:$0xff]
        %v317 = vld [vmem:[%s134 + $0x508] sm:$0xff]
        %v318 = vld [vmem:[%s134 + $0x510] sm:$0xff]
        %v319 = vld [vmem:[%s134 + $0x518] sm:$0xff]
        %v320 = vld [vmem:[%s134 + $0x520] sm:$0xff]
        %v321 = vld [vmem:[%s134 + $0x528] sm:$0xff]
        %v322 = vld [vmem:[%s134 + $0x530] sm:$0xff]
        %v323 = vld [vmem:[%s134 + $0x538] sm:$0xff]
        %v324 = vld [vmem:[%s134 + $0x540] sm:$0xff]
        %v325 = vld [vmem:[%s134 + $0x548] sm:$0xff]
        %v326 = vld [vmem:[%s134 + $0x550] sm:$0xff]
        %v327 = vld [vmem:[%s134 + $0x558] sm:$0xff]
        %v328 = vld [vmem:[%s134 + $0x560] sm:$0xff]
        %v329 = vld [vmem:[%s134 + $0x568] sm:$0xff]
        %v330 = vld [vmem:[%s134 + $0x570] sm:$0xff]
        %v331 = vld [vmem:[%s134 + $0x578] sm:$0xff]
        %v332 = vld [vmem:[%s134 + $0x580] sm:$0xff]
        %v333 = vld [vmem:[%s134 + $0x588] sm:$0xff]
        %v334 = vld [vmem:[%s134 + $0x590] sm:$0xff]
        %v335 = vld [vmem:[%s134 + $0x598] sm:$0xff]
        %v336 = vld [vmem:[%s134 + $0x5a0] sm:$0xff]
        %v337 = vld [vmem:[%s134 + $0x5a8] sm:$0xff]
        %v338 = vld [vmem:[%s134 + $0x5b0] sm:$0xff]
        %v339 = vld [vmem:[%s134 + $0x5b8] sm:$0xff]
        %v340 = vld [vmem:[%s134 + $0x5c0] sm:$0xff]
        %v341 = vld [vmem:[%s134 + $0x5c8] sm:$0xff]
        %v342 = vld [vmem:[%s134 + $0x5d0] sm:$0xff]
        %v343 = vld [vmem:[%s134 + $0x5d8] sm:$0xff]
        %v344 = vld [vmem:[%s134 + $0x5e0] sm:$0xff]
        %v345 = vld [vmem:[%s134 + $0x5e8] sm:$0xff]
        %v346 = vld [vmem:[%s134 + $0x5f0] sm:$0xff]
        %v347 = vld [vmem:[%s134 + $0x5f8] sm:$0xff]
        %v348 = vld [vmem:[%s134 + $0x600] sm:$0xff]
        %v349 = vld [vmem:[%s134 + $0x608] sm:$0xff]
        %v350 = vld [vmem:[%s134 + $0x610] sm:$0xff]
        %v351 = vld [vmem:[%s134 + $0x618] sm:$0xff]
        %v352 = vld [vmem:[%s134 + $0x620] sm:$0xff]
        %v353 = vld [vmem:[%s134 + $0x628] sm:$0xff]
        %v354 = vld [vmem:[%s134 + $0x630] sm:$0xff]
        %v355 = vld [vmem:[%s134 + $0x638] sm:$0xff]
        %v356 = vld [vmem:[%s134 + $0x640] sm:$0xff]
        %v357 = vld [vmem:[%s134 + $0x648] sm:$0xff]
        %v358 = vld [vmem:[%s134 + $0x650] sm:$0xff]
        %v359 = vld [vmem:[%s134 + $0x658] sm:$0xff]
        %v360 = vld [vmem:[%s134 + $0x660] sm:$0xff]
        %v361 = vld [vmem:[%s134 + $0x668] sm:$0xff]
        %v362 = vld [vmem:[%s134 + $0x670] sm:$0xff]
        %v363 = vld [vmem:[%s134 + $0x678] sm:$0xff]
        %v364 = vld [vmem:[%s134 + $0x680] sm:$0xff]
        %v365 = vld [vmem:[%s134 + $0x688] sm:$0xff]
        %v366 = vld [vmem:[%s134 + $0x690] sm:$0xff]
        %v367 = vld [vmem:[%s134 + $0x698] sm:$0xff]
        %v368 = vld [vmem:[%s134 + $0x6a0] sm:$0xff]
        %v369 = vld [vmem:[%s134 + $0x6a8] sm:$0xff]
        %v370 = vld [vmem:[%s134 + $0x6b0] sm:$0xff]
        %v371 = vld [vmem:[%s134 + $0x6b8] sm:$0xff]
        %v372 = vld [vmem:[%s134 + $0x6c0] sm:$0xff]
        %v373 = vld [vmem:[%s134 + $0x6c8] sm:$0xff]
        %v374 = vld [vmem:[%s134 + $0x6d0] sm:$0xff]
        %v375 = vld [vmem:[%s134 + $0x6d8] sm:$0xff]
        %v376 = vld [vmem:[%s134 + $0x6e0] sm:$0xff]
        %v377 = vld [vmem:[%s134 + $0x6e8] sm:$0xff]
        %v378 = vld [vmem:[%s134 + $0x6f0] sm:$0xff]
        %v379 = vld [vmem:[%s134 + $0x6f8] sm:$0xff]
        %v380 = vld [vmem:[%s134 + $0x700] sm:$0xff]
        %v381 = vld [vmem:[%s134 + $0x708] sm:$0xff]
        %v382 = vld [vmem:[%s134 + $0x710] sm:$0xff]
        %v383 = vld [vmem:[%s134 + $0x718] sm:$0xff]
        %v384 = vld [vmem:[%s134 + $0x720] sm:$0xff]
        %v385 = vld [vmem:[%s134 + $0x728] sm:$0xff]
        %v386 = vld [vmem:[%s134 + $0x730] sm:$0xff]
        %v387 = vld [vmem:[%s134 + $0x738] sm:$0xff]
        %v388 = vld [vmem:[%s134 + $0x740] sm:$0xff]
        %v389 = vld [vmem:[%s134 + $0x748] sm:$0xff]
        %v390 = vld [vmem:[%s134 + $0x750] sm:$0xff]
        %v391 = vld [vmem:[%s134 + $0x758] sm:$0xff]
        %v392 = vld [vmem:[%s134 + $0x760] sm:$0xff]
        %v393 = vld [vmem:[%s134 + $0x768] sm:$0xff]
        %v394 = vld [vmem:[%s134 + $0x770] sm:$0xff]
        %v395 = vld [vmem:[%s134 + $0x778] sm:$0xff]
        %v396 = vld [vmem:[%s134 + $0x780] sm:$0xff]
        %v397 = vld [vmem:[%s134 + $0x788] sm:$0xff]
        %v398 = vld [vmem:[%s134 + $0x790] sm:$0xff]
        %v399 = vld [vmem:[%s134 + $0x798] sm:$0xff]
        %v400 = vld [vmem:[%s134 + $0x7a0] sm:$0xff]
        %v401 = vld [vmem:[%s134 + $0x7a8] sm:$0xff]
        %v402 = vld [vmem:[%s134 + $0x7b0] sm:$0xff]
        %v403 = vld [vmem:[%s134 + $0x7b8] sm:$0xff]
        %v404 = vld [vmem:[%s134 + $0x7c0] sm:$0xff]
        %v405 = vld [vmem:[%s134 + $0x7c8] sm:$0xff]
        %v406 = vld [vmem:[%s134 + $0x7d0] sm:$0xff]
        %v407 = vld [vmem:[%s134 + $0x7d8] sm:$0xff]
        %v408 = vld [vmem:[%s134 + $0x7e0] sm:$0xff]
        %v409 = vld [vmem:[%s134 + $0x7e8] sm:$0xff]
        %v410 = vld [vmem:[%s134 + $0x7f0] sm:$0xff]
        %v411 = vld [vmem:[%s134 + $0x7f8] sm:$0xff]
        %v412 = vld [vmem:[%s134 + $0x800] sm:$0xff]
        %v413 = vld [vmem:[%s134 + $0x808] sm:$0xff]
        %v414 = vld [vmem:[%s134 + $0x810] sm:$0xff]
        %v415 = vld [vmem:[%s134 + $0x818] sm:$0xff]
        %v416 = vld [vmem:[%s134 + $0x820] sm:$0xff]
        %v417 = vld [vmem:[%s134 + $0x828] sm:$0xff]
        %v418 = vld [vmem:[%s134 + $0x830] sm:$0xff]
        %v419 = vld [vmem:[%s134 + $0x838] sm:$0xff]
        %v420 = vld [vmem:[%s134 + $0x840] sm:$0xff]
        %v421 = vld [vmem:[%s134 + $0x848] sm:$0xff]
        %v422 = vld [vmem:[%s134 + $0x850] sm:$0xff]
        %v423 = vld [vmem:[%s134 + $0x858] sm:$0xff]
        %v424 = vld [vmem:[%s134 + $0x860] sm:$0xff]
        %v425 = vld [vmem:[%s134 + $0x868] sm:$0xff]
        %v426 = vld [vmem:[%s134 + $0x870] sm:$0xff]
        %v427 = vld [vmem:[%s134 + $0x878] sm:$0xff]
        %v428 = vld [vmem:[%s134 + $0x880] sm:$0xff]
        %v429 = vld [vmem:[%s134 + $0x888] sm:$0xff]
        %v430 = vld [vmem:[%s134 + $0x890] sm:$0xff]
        %v431 = vld [vmem:[%s134 + $0x898] sm:$0xff]
        %v432 = vld [vmem:[%s134 + $0x8a0] sm:$0xff]
        %v433 = vld [vmem:[%s134 + $0x8a8] sm:$0xff]
        %v434 = vld [vmem:[%s134 + $0x8b0] sm:$0xff]
        %v435 = vld [vmem:[%s134 + $0x8b8] sm:$0xff]
        %v436 = vld [vmem:[%s134 + $0x8c0] sm:$0xff]
        %v437 = vld [vmem:[%s134 + $0x8c8] sm:$0xff]
        %v438 = vld [vmem:[%s134 + $0x8d0] sm:$0xff]
        %v439 = vld [vmem:[%s134 + $0x8d8] sm:$0xff]
        %v440 = vld [vmem:[%s134 + $0x8e0] sm:$0xff]
        %v441 = vld [vmem:[%s134 + $0x8e8] sm:$0xff]
        %v442 = vld [vmem:[%s134 + $0x8f0] sm:$0xff]
        %v443 = vld [vmem:[%s134 + $0x8f8] sm:$0xff]
        %v444 = vld [vmem:[%s134 + $0x900] sm:$0xff]
        %v445 = vld [vmem:[%s134 + $0x908] sm:$0xff]
        %v446 = vld [vmem:[%s134 + $0x910] sm:$0xff]
        %v447 = vld [vmem:[%s134 + $0x918] sm:$0xff]
        %v448 = vld [vmem:[%s134 + $0x920] sm:$0xff]
        %v449 = vld [vmem:[%s134 + $0x928] sm:$0xff]
        %v450 = vld [vmem:[%s134 + $0x930] sm:$0xff]
        %v451 = vld [vmem:[%s134 + $0x938] sm:$0xff]
        %v452 = vld [vmem:[%s134 + $0x940] sm:$0xff]
        %v453 = vld [vmem:[%s134 + $0x948] sm:$0xff]
        %v454 = vld [vmem:[%s134 + $0x950] sm:$0xff]
        %v455 = vld [vmem:[%s134 + $0x958] sm:$0xff]
        %v456 = vld [vmem:[%s134 + $0x960] sm:$0xff]
        %v457 = vld [vmem:[%s134 + $0x968] sm:$0xff]
        %v458 = vld [vmem:[%s134 + $0x970] sm:$0xff]
        %v459 = vld [vmem:[%s134 + $0x978] sm:$0xff]
        %v460 = vld [vmem:[%s134 + $0x980] sm:$0xff]
        %v461 = vld [vmem:[%s134 + $0x988] sm:$0xff]
        %v462 = vld [vmem:[%s134 + $0x990] sm:$0xff]
        %v463 = vld [vmem:[%s134 + $0x998] sm:$0xff]
        %v464 = vld [vmem:[%s134 + $0x9a0] sm:$0xff]
        %v465 = vld [vmem:[%s134 + $0x9a8] sm:$0xff]
        %v466 = vld [vmem:[%s134 + $0x9b0] sm:$0xff]
        %v467 = vld [vmem:[%s134 + $0x9b8] sm:$0xff]
        %v468 = vld [vmem:[%s134 + $0x9c0] sm:$0xff]
        %v469 = vld [vmem:[%s134 + $0x9c8] sm:$0xff]
        %v470 = vld [vmem:[%s134 + $0x9d0] sm:$0xff]
        %v471 = vld [vmem:[%s134 + $0x9d8] sm:$0xff]
        %v472 = vld [vmem:[%s134 + $0x9e0] sm:$0xff]
        %v473 = vld [vmem:[%s134 + $0x9e8] sm:$0xff]
        %v474 = vld [vmem:[%s134 + $0x9f0] sm:$0xff]
        %v475 = vld [vmem:[%s134 + $0x9f8] sm:$0xff]
        %v476 = vld [vmem:[%s134 + $0xa00] sm:$0xff]
        %v477 = vld [vmem:[%s134 + $0xa08] sm:$0xff]
        %v478 = vld [vmem:[%s134 + $0xa10] sm:$0xff]
        %v479 = vld [vmem:[%s134 + $0xa18] sm:$0xff]
        %v480 = vld [vmem:[%s134 + $0xa20] sm:$0xff]
        %v481 = vld [vmem:[%s134 + $0xa28] sm:$0xff]
        %v482 = vld [vmem:[%s134 + $0xa30] sm:$0xff]
        %v483 = vld [vmem:[%s134 + $0xa38] sm:$0xff]
        %v484 = vld [vmem:[%s134 + $0xa40] sm:$0xff]
        %v485 = vld [vmem:[%s134 + $0xa48] sm:$0xff]
        %v486 = vld [vmem:[%s134 + $0xa50] sm:$0xff]
        %v487 = vld [vmem:[%s134 + $0xa58] sm:$0xff]
        %v488 = vld [vmem:[%s134 + $0xa60] sm:$0xff]
        %v489 = vld [vmem:[%s134 + $0xa68] sm:$0xff]
        %v490 = vld [vmem:[%s134 + $0xa70] sm:$0xff]
        %v491 = vld [vmem:[%s134 + $0xa78] sm:$0xff]
        %v492 = vld [vmem:[%s134 + $0xa80] sm:$0xff]
        %v493 = vld [vmem:[%s134 + $0xa88] sm:$0xff]
        %v494 = vld [vmem:[%s134 + $0xa90] sm:$0xff]
        %v495 = vld [vmem:[%s134 + $0xa98] sm:$0xff]
        %v496 = vld [vmem:[%s134 + $0xaa0] sm:$0xff]
        %v497 = vld [vmem:[%s134 + $0xaa8] sm:$0xff]
        %v498 = vld [vmem:[%s134 + $0xab0] sm:$0xff]
        %v499 = vld [vmem:[%s134 + $0xab8] sm:$0xff]
        %v500 = vld [vmem:[%s134 + $0xac0] sm:$0xff]
        %v501 = vld [vmem:[%s134 + $0xac8] sm:$0xff]
        %v502 = vld [vmem:[%s134 + $0xad0] sm:$0xff]
        %v503 = vld [vmem:[%s134 + $0xad8] sm:$0xff]
        %v504 = vld [vmem:[%s134 + $0xae0] sm:$0xff]
        %v505 = vld [vmem:[%s134 + $0xae8] sm:$0xff]
        %v506 = vld [vmem:[%s134 + $0xaf0] sm:$0xff]
        %v507 = vld [vmem:[%s134 + $0xaf8] sm:$0xff]
        %v508 = vld [vmem:[%s134 + $0xb00] sm:$0xff]
        %v509 = vld [vmem:[%s134 + $0xb08] sm:$0xff]
        %v510 = vld [vmem:[%s134 + $0xb10] sm:$0xff]
        %v511 = vld [vmem:[%s134 + $0xb18] sm:$0xff]
        %v512 = vld [vmem:[%s134 + $0xb20] sm:$0xff]
        %v513 = vld [vmem:[%s134 + $0xb28] sm:$0xff]
        %v514 = vld [vmem:[%s134 + $0xb30] sm:$0xff]
        %v515 = vld [vmem:[%s134 + $0xb38] sm:$0xff]
        %v516 = vld [vmem:[%s134 + $0xb40] sm:$0xff]
        %v517 = vld [vmem:[%s134 + $0xb48] sm:$0xff]
        %v518 = vld [vmem:[%s134 + $0xb50] sm:$0xff]
        %v519 = vld [vmem:[%s134 + $0xb58] sm:$0xff]
        %v520 = vld [vmem:[%s134 + $0xb60] sm:$0xff]
        %v521 = vld [vmem:[%s134 + $0xb68] sm:$0xff]
        %v522 = vld [vmem:[%s134 + $0xb70] sm:$0xff]
        %v523 = vld [vmem:[%s134 + $0xb78] sm:$0xff]
        %v524 = vld [vmem:[%s134 + $0xb80] sm:$0xff]
        %v525 = vld [vmem:[%s134 + $0xb88] sm:$0xff]
        %v526 = vld [vmem:[%s134 + $0xb90] sm:$0xff]
        %v527 = vld [vmem:[%s134 + $0xb98] sm:$0xff]
        %v528 = vld [vmem:[%s134 + $0xba0] sm:$0xff]
        %v529 = vld [vmem:[%s134 + $0xba8] sm:$0xff]
        %v530 = vld [vmem:[%s134 + $0xbb0] sm:$0xff]
        %v531 = vld [vmem:[%s134 + $0xbb8] sm:$0xff]
        %v532 = vld [vmem:[%s134 + $0xbc0] sm:$0xff]
        %v533 = vld [vmem:[%s134 + $0xbc8] sm:$0xff]
        %v534 = vld [vmem:[%s134 + $0xbd0] sm:$0xff]
        %v535 = vld [vmem:[%s134 + $0xbd8] sm:$0xff]
        %v536 = vld [vmem:[%s134 + $0xbe0] sm:$0xff]
        %v537 = vld [vmem:[%s134 + $0xbe8] sm:$0xff]
        %v538 = vld [vmem:[%s134 + $0xbf0] sm:$0xff]
        %v539 = vld [vmem:[%s134 + $0xbf8] sm:$0xff]
        %v540 = vld [vmem:[%s134 + $0xc00] sm:$0xff]
        %v541 = vld [vmem:[%s134 + $0xc08] sm:$0xff]
        %v542 = vld [vmem:[%s134 + $0xc10] sm:$0xff]
        %v543 = vld [vmem:[%s134 + $0xc18] sm:$0xff]
        %v544 = vld [vmem:[%s134 + $0xc20] sm:$0xff]
        %v545 = vld [vmem:[%s134 + $0xc28] sm:$0xff]
        %v546 = vld [vmem:[%s134 + $0xc30] sm:$0xff]
        %v547 = vld [vmem:[%s134 + $0xc38] sm:$0xff]
        %v548 = vld [vmem:[%s134 + $0xc40] sm:$0xff]
        %v549 = vld [vmem:[%s134 + $0xc48] sm:$0xff]
        %v550 = vld [vmem:[%s134 + $0xc50] sm:$0xff]
        %v551 = vld [vmem:[%s134 + $0xc58] sm:$0xff]
        %v552 = vld [vmem:[%s134 + $0xc60] sm:$0xff]
        %v553 = vld [vmem:[%s134 + $0xc68] sm:$0xff]
        %v554 = vld [vmem:[%s134 + $0xc70] sm:$0xff]
        %v555 = vld [vmem:[%s134 + $0xc78] sm:$0xff]
        %v556 = vld [vmem:[%s134 + $0xc80] sm:$0xff]
        %v557 = vld [vmem:[%s134 + $0xc88] sm:$0xff]
        %v558 = vld [vmem:[%s134 + $0xc90] sm:$0xff]
        %v559 = vld [vmem:[%s134 + $0xc98] sm:$0xff]
        %v560 = vld [vmem:[%s134 + $0xca0] sm:$0xff]
        %v561 = vld [vmem:[%s134 + $0xca8] sm:$0xff]
        %v562 = vld [vmem:[%s134 + $0xcb0] sm:$0xff]
        %v563 = vld [vmem:[%s134 + $0xcb8] sm:$0xff]
        %v564 = vld [vmem:[%s134 + $0xcc0] sm:$0xff]
        %v565 = vld [vmem:[%s134 + $0xcc8] sm:$0xff]
        %v566 = vld [vmem:[%s134 + $0xcd0] sm:$0xff]
        %v567 = vld [vmem:[%s134 + $0xcd8] sm:$0xff]
        %v568 = vld [vmem:[%s134 + $0xce0] sm:$0xff]
        %v569 = vld [vmem:[%s134 + $0xce8] sm:$0xff]
        %v570 = vld [vmem:[%s134 + $0xcf0] sm:$0xff]
        %v571 = vld [vmem:[%s134 + $0xcf8] sm:$0xff]
        %v572 = vld [vmem:[%s134 + $0xd00] sm:$0xff]
        %v573 = vld [vmem:[%s134 + $0xd08] sm:$0xff]
        %v574 = vld [vmem:[%s134 + $0xd10] sm:$0xff]
        %v575 = vld [vmem:[%s134 + $0xd18] sm:$0xff]
        %v576 = vld [vmem:[%s134 + $0xd20] sm:$0xff]
        %v577 = vld [vmem:[%s134 + $0xd28] sm:$0xff]
        %v578 = vld [vmem:[%s134 + $0xd30] sm:$0xff]
        %v579 = vld [vmem:[%s134 + $0xd38] sm:$0xff]
        %v580 = vld [vmem:[%s134 + $0xd40] sm:$0xff]
        %v581 = vld [vmem:[%s134 + $0xd48] sm:$0xff]
        %v582 = vld [vmem:[%s134 + $0xd50] sm:$0xff]
        %v583 = vld [vmem:[%s134 + $0xd58] sm:$0xff]
        %v584 = vld [vmem:[%s134 + $0xd60] sm:$0xff]
        %v585 = vld [vmem:[%s134 + $0xd68] sm:$0xff]
        %v586 = vld [vmem:[%s134 + $0xd70] sm:$0xff]
        %v587 = vld [vmem:[%s134 + $0xd78] sm:$0xff]
        %v588 = vld [vmem:[%s134 + $0xd80] sm:$0xff]
        %v589 = vld [vmem:[%s134 + $0xd88] sm:$0xff]
        %v590 = vld [vmem:[%s134 + $0xd90] sm:$0xff]
        %v591 = vld [vmem:[%s134 + $0xd98] sm:$0xff]
        %v592 = vld [vmem:[%s134 + $0xda0] sm:$0xff]
        %v593 = vld [vmem:[%s134 + $0xda8] sm:$0xff]
        %v594 = vld [vmem:[%s134 + $0xdb0] sm:$0xff]
        %v595 = vld [vmem:[%s134 + $0xdb8] sm:$0xff]
        %v596 = vld [vmem:[%s134 + $0xdc0] sm:$0xff]
        %v597 = vld [vmem:[%s134 + $0xdc8] sm:$0xff]
        %v598 = vld [vmem:[%s134 + $0xdd0] sm:$0xff]
        %v599 = vld [vmem:[%s134 + $0xdd8] sm:$0xff]
        %v600 = vld [vmem:[%s134 + $0xde0] sm:$0xff]
        %v601 = vld [vmem:[%s134 + $0xde8] sm:$0xff]
        %v602 = vld [vmem:[%s134 + $0xdf0] sm:$0xff]
        %v603 = vld [vmem:[%s134 + $0xdf8] sm:$0xff]
        %v604 = vld [vmem:[%s134 + $0xe00] sm:$0xff]
        %v605 = vld [vmem:[%s134 + $0xe08] sm:$0xff]
        %v606 = vld [vmem:[%s134 + $0xe10] sm:$0xff]
        %v607 = vld [vmem:[%s134 + $0xe18] sm:$0xff]
        %v608 = vld [vmem:[%s134 + $0xe20] sm:$0xff]
        %v609 = vld [vmem:[%s134 + $0xe28] sm:$0xff]
        %v610 = vld [vmem:[%s134 + $0xe30] sm:$0xff]
        %v611 = vld [vmem:[%s134 + $0xe38] sm:$0xff]
        %v612 = vld [vmem:[%s134 + $0xe40] sm:$0xff]
        %v613 = vld [vmem:[%s134 + $0xe48] sm:$0xff]
        %v614 = vld [vmem:[%s134 + $0xe50] sm:$0xff]
        %v615 = vld [vmem:[%s134 + $0xe58] sm:$0xff]
        %v616 = vld [vmem:[%s134 + $0xe60] sm:$0xff]
        %v617 = vld [vmem:[%s134 + $0xe68] sm:$0xff]
        %v618 = vld [vmem:[%s134 + $0xe70] sm:$0xff]
        %v619 = vld [vmem:[%s134 + $0xe78] sm:$0xff]
        %v620 = vld [vmem:[%s134 + $0xe80] sm:$0xff]
        %v621 = vld [vmem:[%s134 + $0xe88] sm:$0xff]
        %v622 = vld [vmem:[%s134 + $0xe90] sm:$0xff]
        %v623 = vld [vmem:[%s134 + $0xe98] sm:$0xff]
        %v624 = vld [vmem:[%s134 + $0xea0] sm:$0xff]
        %v625 = vld [vmem:[%s134 + $0xea8] sm:$0xff]
        %v626 = vld [vmem:[%s134 + $0xeb0] sm:$0xff]
        %v627 = vld [vmem:[%s134 + $0xeb8] sm:$0xff]
        %v628 = vld [vmem:[%s134 + $0xec0] sm:$0xff]
        %v629 = vld [vmem:[%s134 + $0xec8] sm:$0xff]
        %v630 = vld [vmem:[%s134 + $0xed0] sm:$0xff]
        %v631 = vld [vmem:[%s134 + $0xed8] sm:$0xff]
        %v632 = vld [vmem:[%s134 + $0xee0] sm:$0xff]
        %v633 = vld [vmem:[%s134 + $0xee8] sm:$0xff]
        %v634 = vld [vmem:[%s134 + $0xef0] sm:$0xff]
        %v635 = vld [vmem:[%s134 + $0xef8] sm:$0xff]
        %v636 = vld [vmem:[%s134 + $0xf00] sm:$0xff]
        %v637 = vld [vmem:[%s134 + $0xf08] sm:$0xff]
        %v638 = vld [vmem:[%s134 + $0xf10] sm:$0xff]
        %v639 = vld [vmem:[%s134 + $0xf18] sm:$0xff]
        %v640 = vld [vmem:[%s134 + $0xf20] sm:$0xff]
        %v641 = vld [vmem:[%s134 + $0xf28] sm:$0xff]
        %v642 = vld [vmem:[%s134 + $0xf30] sm:$0xff]
        %v643 = vld [vmem:[%s134 + $0xf38] sm:$0xff]
        %v644 = vld [vmem:[%s134 + $0xf40] sm:$0xff]
        %v645 = vld [vmem:[%s134 + $0xf48] sm:$0xff]
        %v646 = vld [vmem:[%s134 + $0xf50] sm:$0xff]
        %v647 = vld [vmem:[%s134 + $0xf58] sm:$0xff]
        %v648 = vld [vmem:[%s134 + $0xf60] sm:$0xff]
        %v649 = vld [vmem:[%s134 + $0xf68] sm:$0xff]
        %v650 = vld [vmem:[%s134 + $0xf70] sm:$0xff]
        %v651 = vld [vmem:[%s134 + $0xf78] sm:$0xff]
        %v652 = vld [vmem:[%s134 + $0xf80] sm:$0xff]
        %v653 = vld [vmem:[%s134 + $0xf88] sm:$0xff]
        %v654 = vld [vmem:[%s134 + $0xf90] sm:$0xff]
        %v655 = vld [vmem:[%s134 + $0xf98] sm:$0xff]
        %v656 = vld [vmem:[%s134 + $0xfa0] sm:$0xff]
        %v657 = vld [vmem:[%s134 + $0xfa8] sm:$0xff]
        %v658 = vld [vmem:[%s134 + $0xfb0] sm:$0xff]
        %v659 = vld [vmem:[%s134 + $0xfb8] sm:$0xff]
        %v660 = vld [vmem:[%s134 + $0xfc0] sm:$0xff]
        %v661 = vld [vmem:[%s134 + $0xfc8] sm:$0xff]
        %v662 = vld [vmem:[%s134 + $0xfd0] sm:$0xff]
        %v663 = vld [vmem:[%s134 + $0xfd8] sm:$0xff]
        %v664 = vld [vmem:[%s134 + $0xfe0] sm:$0xff]
        %v665 = vld [vmem:[%s134 + $0xfe8] sm:$0xff]
        %v666 = vld [vmem:[%s134 + $0xff0] sm:$0xff]
        %v667 = vld [vmem:[%s134 + $0xff8] sm:$0xff]
        %v668 = vand.u32 2147483647, %v156
        %v669 = vand.u32 2147483647, %v157
        %v670 = vand.u32 2147483647, %v158
        %v671 = vand.u32 2147483647, %v159
        %v672 = vand.u32 2147483647, %v160
        %v673 = vand.u32 2147483647, %v161
        %v674 = vand.u32 2147483647, %v162
        %v675 = vand.u32 2147483647, %v163
        %v676 = vand.u32 2147483647, %v164
        %v677 = vand.u32 2147483647, %v165
        %v678 = vand.u32 2147483647, %v166
        %v679 = vand.u32 2147483647, %v167
        %v680 = vand.u32 2147483647, %v168
        %v681 = vand.u32 2147483647, %v169
        %v682 = vand.u32 2147483647, %v170
        %v683 = vand.u32 2147483647, %v171
        %v684 = vand.u32 2147483647, %v172
        %v685 = vand.u32 2147483647, %v173
        %v686 = vand.u32 2147483647, %v174
        %v687 = vand.u32 2147483647, %v175
        %v688 = vand.u32 2147483647, %v176
        %v689 = vand.u32 2147483647, %v177
        %v690 = vand.u32 2147483647, %v178
        %v691 = vand.u32 2147483647, %v179
        %v692 = vand.u32 2147483647, %v180
        %v693 = vand.u32 2147483647, %v181
        %v694 = vand.u32 2147483647, %v182
        %v695 = vand.u32 2147483647, %v183
        %v696 = vand.u32 2147483647, %v184
        %v697 = vand.u32 2147483647, %v185
        %v698 = vand.u32 2147483647, %v186
        %v699 = vand.u32 2147483647, %v187
        %v700 = vand.u32 2147483647, %v188
        %v701 = vand.u32 2147483647, %v189
        %v702 = vand.u32 2147483647, %v190
        %v703 = vand.u32 2147483647, %v191
        %v704 = vand.u32 2147483647, %v192
        %v705 = vand.u32 2147483647, %v193
        %v706 = vand.u32 2147483647, %v194
        %v707 = vand.u32 2147483647, %v195
        %v708 = vand.u32 2147483647, %v196
        %v709 = vand.u32 2147483647, %v197
        %v710 = vand.u32 2147483647, %v198
        %v711 = vand.u32 2147483647, %v199
        %v712 = vand.u32 2147483647, %v200
        %v713 = vand.u32 2147483647, %v201
        %v714 = vand.u32 2147483647, %v202
        %v715 = vand.u32 2147483647, %v203
        %v716 = vand.u32 2147483647, %v204
        %v717 = vand.u32 2147483647, %v205
        %v718 = vand.u32 2147483647, %v206
        %v719 = vand.u32 2147483647, %v207
        %v720 = vand.u32 2147483647, %v208
        %v721 = vand.u32 2147483647, %v209
        %v722 = vand.u32 2147483647, %v210
        %v723 = vand.u32 2147483647, %v211
        %v724 = vand.u32 2147483647, %v212
        %v725 = vand.u32 2147483647, %v213
        %v726 = vand.u32 2147483647, %v214
        %v727 = vand.u32 2147483647, %v215
        %v728 = vand.u32 2147483647, %v216
        %v729 = vand.u32 2147483647, %v217
        %v730 = vand.u32 2147483647, %v218
        %v731 = vand.u32 2147483647, %v219
        %v732 = vand.u32 2147483647, %v220
        %v733 = vand.u32 2147483647, %v221
        %v734 = vand.u32 2147483647, %v222
        %v735 = vand.u32 2147483647, %v223
        %v736 = vand.u32 2147483647, %v224
        %v737 = vand.u32 2147483647, %v225
        %v738 = vand.u32 2147483647, %v226
        %v739 = vand.u32 2147483647, %v227
        %v740 = vand.u32 2147483647, %v228
        %v741 = vand.u32 2147483647, %v229
        %v742 = vand.u32 2147483647, %v230
        %v743 = vand.u32 2147483647, %v231
        %v744 = vand.u32 2147483647, %v232
        %v745 = vand.u32 2147483647, %v233
        %v746 = vand.u32 2147483647, %v234
        %v747 = vand.u32 2147483647, %v235
        %v748 = vand.u32 2147483647, %v236
        %v749 = vand.u32 2147483647, %v237
        %v750 = vand.u32 2147483647, %v238
        %v751 = vand.u32 2147483647, %v239
        %v752 = vand.u32 2147483647, %v240
        %v753 = vand.u32 2147483647, %v241
        %v754 = vand.u32 2147483647, %v242
        %v755 = vand.u32 2147483647, %v243
        %v756 = vand.u32 2147483647, %v244
        %v757 = vand.u32 2147483647, %v245
        %v758 = vand.u32 2147483647, %v246
        %v759 = vand.u32 2147483647, %v247
        %v760 = vand.u32 2147483647, %v248
        %v761 = vand.u32 2147483647, %v249
        %v762 = vand.u32 2147483647, %v250
        %v763 = vand.u32 2147483647, %v251
        %v764 = vand.u32 2147483647, %v252
        %v765 = vand.u32 2147483647, %v253
        %v766 = vand.u32 2147483647, %v254
        %v767 = vand.u32 2147483647, %v255
        %v768 = vand.u32 2147483647, %v256
        %v769 = vand.u32 2147483647, %v257
        %v770 = vand.u32 2147483647, %v258
        %v771 = vand.u32 2147483647, %v259
        %v772 = vand.u32 2147483647, %v260
        %v773 = vand.u32 2147483647, %v261
        %v774 = vand.u32 2147483647, %v262
        %v775 = vand.u32 2147483647, %v263
        %v776 = vand.u32 2147483647, %v264
        %v777 = vand.u32 2147483647, %v265
        %v778 = vand.u32 2147483647, %v266
        %v779 = vand.u32 2147483647, %v267
        %v780 = vand.u32 2147483647, %v268
        %v781 = vand.u32 2147483647, %v269
        %v782 = vand.u32 2147483647, %v270
        %v783 = vand.u32 2147483647, %v271
        %v784 = vand.u32 2147483647, %v272
        %v785 = vand.u32 2147483647, %v273
        %v786 = vand.u32 2147483647, %v274
        %v787 = vand.u32 2147483647, %v275
        %v788 = vand.u32 2147483647, %v276
        %v789 = vand.u32 2147483647, %v277
        %v790 = vand.u32 2147483647, %v278
        %v791 = vand.u32 2147483647, %v279
        %v792 = vand.u32 2147483647, %v280
        %v793 = vand.u32 2147483647, %v281
        %v794 = vand.u32 2147483647, %v282
        %v795 = vand.u32 2147483647, %v283
        %v796 = vand.u32 2147483647, %v284
        %v797 = vand.u32 2147483647, %v285
        %v798 = vand.u32 2147483647, %v286
        %v799 = vand.u32 2147483647, %v287
        %v800 = vand.u32 2147483647, %v288
        %v801 = vand.u32 2147483647, %v289
        %v802 = vand.u32 2147483647, %v290
        %v803 = vand.u32 2147483647, %v291
        %v804 = vand.u32 2147483647, %v292
        %v805 = vand.u32 2147483647, %v293
        %v806 = vand.u32 2147483647, %v294
        %v807 = vand.u32 2147483647, %v295
        %v808 = vand.u32 2147483647, %v296
        %v809 = vand.u32 2147483647, %v297
        %v810 = vand.u32 2147483647, %v298
        %v811 = vand.u32 2147483647, %v299
        %v812 = vand.u32 2147483647, %v300
        %v813 = vand.u32 2147483647, %v301
        %v814 = vand.u32 2147483647, %v302
        %v815 = vand.u32 2147483647, %v303
        %v816 = vand.u32 2147483647, %v304
        %v817 = vand.u32 2147483647, %v305
        %v818 = vand.u32 2147483647, %v306
        %v819 = vand.u32 2147483647, %v307
        %v820 = vand.u32 2147483647, %v308
        %v821 = vand.u32 2147483647, %v309
        %v822 = vand.u32 2147483647, %v310
        %v823 = vand.u32 2147483647, %v311
        %v824 = vand.u32 2147483647, %v312
        %v825 = vand.u32 2147483647, %v313
        %v826 = vand.u32 2147483647, %v314
        %v827 = vand.u32 2147483647, %v315
        %v828 = vand.u32 2147483647, %v316
        %v829 = vand.u32 2147483647, %v317
        %v830 = vand.u32 2147483647, %v318
        %v831 = vand.u32 2147483647, %v319
        %v832 = vand.u32 2147483647, %v320
        %v833 = vand.u32 2147483647, %v321
        %v834 = vand.u32 2147483647, %v322
        %v835 = vand.u32 2147483647, %v323
        %v836 = vand.u32 2147483647, %v324
        %v837 = vand.u32 2147483647, %v325
        %v838 = vand.u32 2147483647, %v326
        %v839 = vand.u32 2147483647, %v327
        %v840 = vand.u32 2147483647, %v328
        %v841 = vand.u32 2147483647, %v329
        %v842 = vand.u32 2147483647, %v330
        %v843 = vand.u32 2147483647, %v331
        %v844 = vand.u32 2147483647, %v332
        %v845 = vand.u32 2147483647, %v333
        %v846 = vand.u32 2147483647, %v334
        %v847 = vand.u32 2147483647, %v335
        %v848 = vand.u32 2147483647, %v336
        %v849 = vand.u32 2147483647, %v337
        %v850 = vand.u32 2147483647, %v338
        %v851 = vand.u32 2147483647, %v339
        %v852 = vand.u32 2147483647, %v340
        %v853 = vand.u32 2147483647, %v341
        %v854 = vand.u32 2147483647, %v342
        %v855 = vand.u32 2147483647, %v343
        %v856 = vand.u32 2147483647, %v344
        %v857 = vand.u32 2147483647, %v345
        %v858 = vand.u32 2147483647, %v346
        %v859 = vand.u32 2147483647, %v347
        %v860 = vand.u32 2147483647, %v348
        %v861 = vand.u32 2147483647, %v349
        %v862 = vand.u32 2147483647, %v350
        %v863 = vand.u32 2147483647, %v351
        %v864 = vand.u32 2147483647, %v352
        %v865 = vand.u32 2147483647, %v353
        %v866 = vand.u32 2147483647, %v354
        %v867 = vand.u32 2147483647, %v355
        %v868 = vand.u32 2147483647, %v356
        %v869 = vand.u32 2147483647, %v357
        %v870 = vand.u32 2147483647, %v358
        %v871 = vand.u32 2147483647, %v359
        %v872 = vand.u32 2147483647, %v360
        %v873 = vand.u32 2147483647, %v361
        %v874 = vand.u32 2147483647, %v362
        %v875 = vand.u32 2147483647, %v363
        %v876 = vand.u32 2147483647, %v364
        %v877 = vand.u32 2147483647, %v365
        %v878 = vand.u32 2147483647, %v366
        %v879 = vand.u32 2147483647, %v367
        %v880 = vand.u32 2147483647, %v368
        %v881 = vand.u32 2147483647, %v369
        %v882 = vand.u32 2147483647, %v370
        %v883 = vand.u32 2147483647, %v371
        %v884 = vand.u32 2147483647, %v372
        %v885 = vand.u32 2147483647, %v373
        %v886 = vand.u32 2147483647, %v374
        %v887 = vand.u32 2147483647, %v375
        %v888 = vand.u32 2147483647, %v376
        %v889 = vand.u32 2147483647, %v377
        %v890 = vand.u32 2147483647, %v378
        %v891 = vand.u32 2147483647, %v379
        %v892 = vand.u32 2147483647, %v380
        %v893 = vand.u32 2147483647, %v381
        %v894 = vand.u32 2147483647, %v382
        %v895 = vand.u32 2147483647, %v383
        %v896 = vand.u32 2147483647, %v384
        %v897 = vand.u32 2147483647, %v385
        %v898 = vand.u32 2147483647, %v386
        %v899 = vand.u32 2147483647, %v387
        %v900 = vand.u32 2147483647, %v388
        %v901 = vand.u32 2147483647, %v389
        %v902 = vand.u32 2147483647, %v390
        %v903 = vand.u32 2147483647, %v391
        %v904 = vand.u32 2147483647, %v392
        %v905 = vand.u32 2147483647, %v393
        %v906 = vand.u32 2147483647, %v394
        %v907 = vand.u32 2147483647, %v395
        %v908 = vand.u32 2147483647, %v396
        %v909 = vand.u32 2147483647, %v397
        %v910 = vand.u32 2147483647, %v398
        %v911 = vand.u32 2147483647, %v399
        %v912 = vand.u32 2147483647, %v400
        %v913 = vand.u32 2147483647, %v401
        %v914 = vand.u32 2147483647, %v402
        %v915 = vand.u32 2147483647, %v403
        %v916 = vand.u32 2147483647, %v404
        %v917 = vand.u32 2147483647, %v405
        %v918 = vand.u32 2147483647, %v406
        %v919 = vand.u32 2147483647, %v407
        %v920 = vand.u32 2147483647, %v408
        %v921 = vand.u32 2147483647, %v409
        %v922 = vand.u32 2147483647, %v410
        %v923 = vand.u32 2147483647, %v411
        %v924 = vand.u32 2147483647, %v412
        %v925 = vand.u32 2147483647, %v413
        %v926 = vand.u32 2147483647, %v414
        %v927 = vand.u32 2147483647, %v415
        %v928 = vand.u32 2147483647, %v416
        %v929 = vand.u32 2147483647, %v417
        %v930 = vand.u32 2147483647, %v418
        %v931 = vand.u32 2147483647, %v419
        %v932 = vand.u32 2147483647, %v420
        %v933 = vand.u32 2147483647, %v421
        %v934 = vand.u32 2147483647, %v422
        %v935 = vand.u32 2147483647, %v423
        %v936 = vand.u32 2147483647, %v424
        %v937 = vand.u32 2147483647, %v425
        %v938 = vand.u32 2147483647, %v426
        %v939 = vand.u32 2147483647, %v427
        %v940 = vand.u32 2147483647, %v428
        %v941 = vand.u32 2147483647, %v429
        %v942 = vand.u32 2147483647, %v430
        %v943 = vand.u32 2147483647, %v431
        %v944 = vand.u32 2147483647, %v432
        %v945 = vand.u32 2147483647, %v433
        %v946 = vand.u32 2147483647, %v434
        %v947 = vand.u32 2147483647, %v435
        %v948 = vand.u32 2147483647, %v436
        %v949 = vand.u32 2147483647, %v437
        %v950 = vand.u32 2147483647, %v438
        %v951 = vand.u32 2147483647, %v439
        %v952 = vand.u32 2147483647, %v440
        %v953 = vand.u32 2147483647, %v441
        %v954 = vand.u32 2147483647, %v442
        %v955 = vand.u32 2147483647, %v443
        %v956 = vand.u32 2147483647, %v444
        %v957 = vand.u32 2147483647, %v445
        %v958 = vand.u32 2147483647, %v446
        %v959 = vand.u32 2147483647, %v447
        %v960 = vand.u32 2147483647, %v448
        %v961 = vand.u32 2147483647, %v449
        %v962 = vand.u32 2147483647, %v450
        %v963 = vand.u32 2147483647, %v451
        %v964 = vand.u32 2147483647, %v452
        %v965 = vand.u32 2147483647, %v453
        %v966 = vand.u32 2147483647, %v454
        %v967 = vand.u32 2147483647, %v455
        %v968 = vand.u32 2147483647, %v456
        %v969 = vand.u32 2147483647, %v457
        %v970 = vand.u32 2147483647, %v458
        %v971 = vand.u32 2147483647, %v459
        %v972 = vand.u32 2147483647, %v460
        %v973 = vand.u32 2147483647, %v461
        %v974 = vand.u32 2147483647, %v462
        %v975 = vand.u32 2147483647, %v463
        %v976 = vand.u32 2147483647, %v464
        %v977 = vand.u32 2147483647, %v465
        %v978 = vand.u32 2147483647, %v466
        %v979 = vand.u32 2147483647, %v467
        %v980 = vand.u32 2147483647, %v468
        %v981 = vand.u32 2147483647, %v469
        %v982 = vand.u32 2147483647, %v470
        %v983 = vand.u32 2147483647, %v471
        %v984 = vand.u32 2147483647, %v472
        %v985 = vand.u32 2147483647, %v473
        %v986 = vand.u32 2147483647, %v474
        %v987 = vand.u32 2147483647, %v475
        %v988 = vand.u32 2147483647, %v476
        %v989 = vand.u32 2147483647, %v477
        %v990 = vand.u32 2147483647, %v478
        %v991 = vand.u32 2147483647, %v479
        %v992 = vand.u32 2147483647, %v480
        %v993 = vand.u32 2147483647, %v481
        %v994 = vand.u32 2147483647, %v482
        %v995 = vand.u32 2147483647, %v483
        %v996 = vand.u32 2147483647, %v484
        %v997 = vand.u32 2147483647, %v485
        %v998 = vand.u32 2147483647, %v486
        %v999 = vand.u32 2147483647, %v487
        %v1000 = vand.u32 2147483647, %v488
        %v1001 = vand.u32 2147483647, %v489
        %v1002 = vand.u32 2147483647, %v490
        %v1003 = vand.u32 2147483647, %v491
        %v1004 = vand.u32 2147483647, %v492
        %v1005 = vand.u32 2147483647, %v493
        %v1006 = vand.u32 2147483647, %v494
        %v1007 = vand.u32 2147483647, %v495
        %v1008 = vand.u32 2147483647, %v496
        %v1009 = vand.u32 2147483647, %v497
        %v1010 = vand.u32 2147483647, %v498
        %v1011 = vand.u32 2147483647, %v499
        %v1012 = vand.u32 2147483647, %v500
        %v1013 = vand.u32 2147483647, %v501
        %v1014 = vand.u32 2147483647, %v502
        %v1015 = vand.u32 2147483647, %v503
        %v1016 = vand.u32 2147483647, %v504
        %v1017 = vand.u32 2147483647, %v505
        %v1018 = vand.u32 2147483647, %v506
        %v1019 = vand.u32 2147483647, %v507
        %v1020 = vand.u32 2147483647, %v508
        %v1021 = vand.u32 2147483647, %v509
        %v1022 = vand.u32 2147483647, %v510
        %v1023 = vand.u32 2147483647, %v511
        %v1024 = vand.u32 2147483647, %v512
        %v1025 = vand.u32 2147483647, %v513
        %v1026 = vand.u32 2147483647, %v514
        %v1027 = vand.u32 2147483647, %v515
        %v1028 = vand.u32 2147483647, %v516
        %v1029 = vand.u32 2147483647, %v517
        %v1030 = vand.u32 2147483647, %v518
        %v1031 = vand.u32 2147483647, %v519
        %v1032 = vand.u32 2147483647, %v520
        %v1033 = vand.u32 2147483647, %v521
        %v1034 = vand.u32 2147483647, %v522
        %v1035 = vand.u32 2147483647, %v523
        %v1036 = vand.u32 2147483647, %v524
        %v1037 = vand.u32 2147483647, %v525
        %v1038 = vand.u32 2147483647, %v526
        %v1039 = vand.u32 2147483647, %v527
        %v1040 = vand.u32 2147483647, %v528
        %v1041 = vand.u32 2147483647, %v529
        %v1042 = vand.u32 2147483647, %v530
        %v1043 = vand.u32 2147483647, %v531
        %v1044 = vand.u32 2147483647, %v532
        %v1045 = vand.u32 2147483647, %v533
        %v1046 = vand.u32 2147483647, %v534
        %v1047 = vand.u32 2147483647, %v535
        %v1048 = vand.u32 2147483647, %v536
        %v1049 = vand.u32 2147483647, %v537
        %v1050 = vand.u32 2147483647, %v538
        %v1051 = vand.u32 2147483647, %v539
        %v1052 = vand.u32 2147483647, %v540
        %v1053 = vand.u32 2147483647, %v541
        %v1054 = vand.u32 2147483647, %v542
        %v1055 = vand.u32 2147483647, %v543
        %v1056 = vand.u32 2147483647, %v544
        %v1057 = vand.u32 2147483647, %v545
        %v1058 = vand.u32 2147483647, %v546
        %v1059 = vand.u32 2147483647, %v547
        %v1060 = vand.u32 2147483647, %v548
        %v1061 = vand.u32 2147483647, %v549
        %v1062 = vand.u32 2147483647, %v550
        %v1063 = vand.u32 2147483647, %v551
        %v1064 = vand.u32 2147483647, %v552
        %v1065 = vand.u32 2147483647, %v553
        %v1066 = vand.u32 2147483647, %v554
        %v1067 = vand.u32 2147483647, %v555
        %v1068 = vand.u32 2147483647, %v556
        %v1069 = vand.u32 2147483647, %v557
        %v1070 = vand.u32 2147483647, %v558
        %v1071 = vand.u32 2147483647, %v559
        %v1072 = vand.u32 2147483647, %v560
        %v1073 = vand.u32 2147483647, %v561
        %v1074 = vand.u32 2147483647, %v562
        %v1075 = vand.u32 2147483647, %v563
        %v1076 = vand.u32 2147483647, %v564
        %v1077 = vand.u32 2147483647, %v565
        %v1078 = vand.u32 2147483647, %v566
        %v1079 = vand.u32 2147483647, %v567
        %v1080 = vand.u32 2147483647, %v568
        %v1081 = vand.u32 2147483647, %v569
        %v1082 = vand.u32 2147483647, %v570
        %v1083 = vand.u32 2147483647, %v571
        %v1084 = vand.u32 2147483647, %v572
        %v1085 = vand.u32 2147483647, %v573
        %v1086 = vand.u32 2147483647, %v574
        %v1087 = vand.u32 2147483647, %v575
        %v1088 = vand.u32 2147483647, %v576
        %v1089 = vand.u32 2147483647, %v577
        %v1090 = vand.u32 2147483647, %v578
        %v1091 = vand.u32 2147483647, %v579
        %v1092 = vand.u32 2147483647, %v580
        %v1093 = vand.u32 2147483647, %v581
        %v1094 = vand.u32 2147483647, %v582
        %v1095 = vand.u32 2147483647, %v583
        %v1096 = vand.u32 2147483647, %v584
        %v1097 = vand.u32 2147483647, %v585
        %v1098 = vand.u32 2147483647, %v586
        %v1099 = vand.u32 2147483647, %v587
        %v1100 = vand.u32 2147483647, %v588
        %v1101 = vand.u32 2147483647, %v589
        %v1102 = vand.u32 2147483647, %v590
        %v1103 = vand.u32 2147483647, %v591
        %v1104 = vand.u32 2147483647, %v592
        %v1105 = vand.u32 2147483647, %v593
        %v1106 = vand.u32 2147483647, %v594
        %v1107 = vand.u32 2147483647, %v595
        %v1108 = vand.u32 2147483647, %v596
        %v1109 = vand.u32 2147483647, %v597
        %v1110 = vand.u32 2147483647, %v598
        %v1111 = vand.u32 2147483647, %v599
        %v1112 = vand.u32 2147483647, %v600
        %v1113 = vand.u32 2147483647, %v601
        %v1114 = vand.u32 2147483647, %v602
        %v1115 = vand.u32 2147483647, %v603
        %v1116 = vand.u32 2147483647, %v604
        %v1117 = vand.u32 2147483647, %v605
        %v1118 = vand.u32 2147483647, %v606
        %v1119 = vand.u32 2147483647, %v607
        %v1120 = vand.u32 2147483647, %v608
        %v1121 = vand.u32 2147483647, %v609
        %v1122 = vand.u32 2147483647, %v610
        %v1123 = vand.u32 2147483647, %v611
        %v1124 = vand.u32 2147483647, %v612
        %v1125 = vand.u32 2147483647, %v613
        %v1126 = vand.u32 2147483647, %v614
        %v1127 = vand.u32 2147483647, %v615
        %v1128 = vand.u32 2147483647, %v616
        %v1129 = vand.u32 2147483647, %v617
        %v1130 = vand.u32 2147483647, %v618
        %v1131 = vand.u32 2147483647, %v619
        %v1132 = vand.u32 2147483647, %v620
        %v1133 = vand.u32 2147483647, %v621
        %v1134 = vand.u32 2147483647, %v622
        %v1135 = vand.u32 2147483647, %v623
        %v1136 = vand.u32 2147483647, %v624
        %v1137 = vand.u32 2147483647, %v625
        %v1138 = vand.u32 2147483647, %v626
        %v1139 = vand.u32 2147483647, %v627
        %v1140 = vand.u32 2147483647, %v628
        %v1141 = vand.u32 2147483647, %v629
        %v1142 = vand.u32 2147483647, %v630
        %v1143 = vand.u32 2147483647, %v631
        %v1144 = vand.u32 2147483647, %v632
        %v1145 = vand.u32 2147483647, %v633
        %v1146 = vand.u32 2147483647, %v634
        %v1147 = vand.u32 2147483647, %v635
        %v1148 = vand.u32 2147483647, %v636
        %v1149 = vand.u32 2147483647, %v637
        %v1150 = vand.u32 2147483647, %v638
        %v1151 = vand.u32 2147483647, %v639
        %v1152 = vand.u32 2147483647, %v640
        %v1153 = vand.u32 2147483647, %v641
        %v1154 = vand.u32 2147483647, %v642
        %v1155 = vand.u32 2147483647, %v643
        %v1156 = vand.u32 2147483647, %v644
        %v1157 = vand.u32 2147483647, %v645
        %v1158 = vand.u32 2147483647, %v646
        %v1159 = vand.u32 2147483647, %v647
        %v1160 = vand.u32 2147483647, %v648
        %v1161 = vand.u32 2147483647, %v649
        %v1162 = vand.u32 2147483647, %v650
        %v1163 = vand.u32 2147483647, %v651
        %v1164 = vand.u32 2147483647, %v652
        %v1165 = vand.u32 2147483647, %v653
        %v1166 = vand.u32 2147483647, %v654
        %v1167 = vand.u32 2147483647, %v655
        %v1168 = vand.u32 2147483647, %v656
        %v1169 = vand.u32 2147483647, %v657
        %v1170 = vand.u32 2147483647, %v658
        %v1171 = vand.u32 2147483647, %v659
        %v1172 = vand.u32 2147483647, %v660
        %v1173 = vand.u32 2147483647, %v661
        %v1174 = vand.u32 2147483647, %v662
        %v1175 = vand.u32 2147483647, %v663
        %v1176 = vand.u32 2147483647, %v664
        %v1177 = vand.u32 2147483647, %v665
        %v1178 = vand.u32 2147483647, %v666
        %v1179 = vand.u32 2147483647, %v667
        %1180 = vst [vmem:[%s153] sm:$0xff] %v668
        %1181 = vst [vmem:[%s153 + $0x8] sm:$0xff] %v669
        %1182 = vst [vmem:[%s153 + $0x10] sm:$0xff] %v670
        %1183 = vst [vmem:[%s153 + $0x18] sm:$0xff] %v671
        %1184 = vst [vmem:[%s153 + $0x20] sm:$0xff] %v672
        %1185 = vst [vmem:[%s153 + $0x28] sm:$0xff] %v673
        %1186 = vst [vmem:[%s153 + $0x30] sm:$0xff] %v674
        %1187 = vst [vmem:[%s153 + $0x38] sm:$0xff] %v675
        %1188 = vst [vmem:[%s153 + $0x40] sm:$0xff] %v676
        %1189 = vst [vmem:[%s153 + $0x48] sm:$0xff] %v677
        %1190 = vst [vmem:[%s153 + $0x50] sm:$0xff] %v678
        %1191 = vst [vmem:[%s153 + $0x58] sm:$0xff] %v679
        %1192 = vst [vmem:[%s153 + $0x60] sm:$0xff] %v680
        %1193 = vst [vmem:[%s153 + $0x68] sm:$0xff] %v681
        %1194 = vst [vmem:[%s153 + $0x70] sm:$0xff] %v682
        %1195 = vst [vmem:[%s153 + $0x78] sm:$0xff] %v683
        %1196 = vst [vmem:[%s153 + $0x80] sm:$0xff] %v684
        %1197 = vst [vmem:[%s153 + $0x88] sm:$0xff] %v685
        %1198 = vst [vmem:[%s153 + $0x90] sm:$0xff] %v686
        %1199 = vst [vmem:[%s153 + $0x98] sm:$0xff] %v687
        %1200 = vst [vmem:[%s153 + $0xa0] sm:$0xff] %v688
        %1201 = vst [vmem:[%s153 + $0xa8] sm:$0xff] %v689
        %1202 = vst [vmem:[%s153 + $0xb0] sm:$0xff] %v690
        %1203 = vst [vmem:[%s153 + $0xb8] sm:$0xff] %v691
        %1204 = vst [vmem:[%s153 + $0xc0] sm:$0xff] %v692
        %1205 = vst [vmem:[%s153 + $0xc8] sm:$0xff] %v693
        %1206 = vst [vmem:[%s153 + $0xd0] sm:$0xff] %v694
        %1207 = vst [vmem:[%s153 + $0xd8] sm:$0xff] %v695
        %1208 = vst [vmem:[%s153 + $0xe0] sm:$0xff] %v696
        %1209 = vst [vmem:[%s153 + $0xe8] sm:$0xff] %v697
        %1210 = vst [vmem:[%s153 + $0xf0] sm:$0xff] %v698
        %1211 = vst [vmem:[%s153 + $0xf8] sm:$0xff] %v699
        %1212 = vst [vmem:[%s153 + $0x100] sm:$0xff] %v700
        %1213 = vst [vmem:[%s153 + $0x108] sm:$0xff] %v701
        %1214 = vst [vmem:[%s153 + $0x110] sm:$0xff] %v702
        %1215 = vst [vmem:[%s153 + $0x118] sm:$0xff] %v703
        %1216 = vst [vmem:[%s153 + $0x120] sm:$0xff] %v704
        %1217 = vst [vmem:[%s153 + $0x128] sm:$0xff] %v705
        %1218 = vst [vmem:[%s153 + $0x130] sm:$0xff] %v706
        %1219 = vst [vmem:[%s153 + $0x138] sm:$0xff] %v707
        %1220 = vst [vmem:[%s153 + $0x140] sm:$0xff] %v708
        %1221 = vst [vmem:[%s153 + $0x148] sm:$0xff] %v709
        %1222 = vst [vmem:[%s153 + $0x150] sm:$0xff] %v710
        %1223 = vst [vmem:[%s153 + $0x158] sm:$0xff] %v711
        %1224 = vst [vmem:[%s153 + $0x160] sm:$0xff] %v712
        %1225 = vst [vmem:[%s153 + $0x168] sm:$0xff] %v713
        %1226 = vst [vmem:[%s153 + $0x170] sm:$0xff] %v714
        %1227 = vst [vmem:[%s153 + $0x178] sm:$0xff] %v715
        %1228 = vst [vmem:[%s153 + $0x180] sm:$0xff] %v716
        %1229 = vst [vmem:[%s153 + $0x188] sm:$0xff] %v717
        %1230 = vst [vmem:[%s153 + $0x190] sm:$0xff] %v718
        %1231 = vst [vmem:[%s153 + $0x198] sm:$0xff] %v719
        %1232 = vst [vmem:[%s153 + $0x1a0] sm:$0xff] %v720
        %1233 = vst [vmem:[%s153 + $0x1a8] sm:$0xff] %v721
        %1234 = vst [vmem:[%s153 + $0x1b0] sm:$0xff] %v722
        %1235 = vst [vmem:[%s153 + $0x1b8] sm:$0xff] %v723
        %1236 = vst [vmem:[%s153 + $0x1c0] sm:$0xff] %v724
        %1237 = vst [vmem:[%s153 + $0x1c8] sm:$0xff] %v725
        %1238 = vst [vmem:[%s153 + $0x1d0] sm:$0xff] %v726
        %1239 = vst [vmem:[%s153 + $0x1d8] sm:$0xff] %v727
        %1240 = vst [vmem:[%s153 + $0x1e0] sm:$0xff] %v728
        %1241 = vst [vmem:[%s153 + $0x1e8] sm:$0xff] %v729
        %1242 = vst [vmem:[%s153 + $0x1f0] sm:$0xff] %v730
        %1243 = vst [vmem:[%s153 + $0x1f8] sm:$0xff] %v731
        %1244 = vst [vmem:[%s153 + $0x200] sm:$0xff] %v732
        %1245 = vst [vmem:[%s153 + $0x208] sm:$0xff] %v733
        %1246 = vst [vmem:[%s153 + $0x210] sm:$0xff] %v734
        %1247 = vst [vmem:[%s153 + $0x218] sm:$0xff] %v735
        %1248 = vst [vmem:[%s153 + $0x220] sm:$0xff] %v736
        %1249 = vst [vmem:[%s153 + $0x228] sm:$0xff] %v737
        %1250 = vst [vmem:[%s153 + $0x230] sm:$0xff] %v738
        %1251 = vst [vmem:[%s153 + $0x238] sm:$0xff] %v739
        %1252 = vst [vmem:[%s153 + $0x240] sm:$0xff] %v740
        %1253 = vst [vmem:[%s153 + $0x248] sm:$0xff] %v741
        %1254 = vst [vmem:[%s153 + $0x250] sm:$0xff] %v742
        %1255 = vst [vmem:[%s153 + $0x258] sm:$0xff] %v743
        %1256 = vst [vmem:[%s153 + $0x260] sm:$0xff] %v744
        %1257 = vst [vmem:[%s153 + $0x268] sm:$0xff] %v745
        %1258 = vst [vmem:[%s153 + $0x270] sm:$0xff] %v746
        %1259 = vst [vmem:[%s153 + $0x278] sm:$0xff] %v747
        %1260 = vst [vmem:[%s153 + $0x280] sm:$0xff] %v748
        %1261 = vst [vmem:[%s153 + $0x288] sm:$0xff] %v749
        %1262 = vst [vmem:[%s153 + $0x290] sm:$0xff] %v750
        %1263 = vst [vmem:[%s153 + $0x298] sm:$0xff] %v751
        %1264 = vst [vmem:[%s153 + $0x2a0] sm:$0xff] %v752
        %1265 = vst [vmem:[%s153 + $0x2a8] sm:$0xff] %v753
        %1266 = vst [vmem:[%s153 + $0x2b0] sm:$0xff] %v754
        %1267 = vst [vmem:[%s153 + $0x2b8] sm:$0xff] %v755
        %1268 = vst [vmem:[%s153 + $0x2c0] sm:$0xff] %v756
        %1269 = vst [vmem:[%s153 + $0x2c8] sm:$0xff] %v757
        %1270 = vst [vmem:[%s153 + $0x2d0] sm:$0xff] %v758
        %1271 = vst [vmem:[%s153 + $0x2d8] sm:$0xff] %v759
        %1272 = vst [vmem:[%s153 + $0x2e0] sm:$0xff] %v760
        %1273 = vst [vmem:[%s153 + $0x2e8] sm:$0xff] %v761
        %1274 = vst [vmem:[%s153 + $0x2f0] sm:$0xff] %v762
        %1275 = vst [vmem:[%s153 + $0x2f8] sm:$0xff] %v763
        %1276 = vst [vmem:[%s153 + $0x300] sm:$0xff] %v764
        %1277 = vst [vmem:[%s153 + $0x308] sm:$0xff] %v765
        %1278 = vst [vmem:[%s153 + $0x310] sm:$0xff] %v766
        %1279 = vst [vmem:[%s153 + $0x318] sm:$0xff] %v767
        %1280 = vst [vmem:[%s153 + $0x320] sm:$0xff] %v768
        %1281 = vst [vmem:[%s153 + $0x328] sm:$0xff] %v769
        %1282 = vst [vmem:[%s153 + $0x330] sm:$0xff] %v770
        %1283 = vst [vmem:[%s153 + $0x338] sm:$0xff] %v771
        %1284 = vst [vmem:[%s153 + $0x340] sm:$0xff] %v772
        %1285 = vst [vmem:[%s153 + $0x348] sm:$0xff] %v773
        %1286 = vst [vmem:[%s153 + $0x350] sm:$0xff] %v774
        %1287 = vst [vmem:[%s153 + $0x358] sm:$0xff] %v775
        %1288 = vst [vmem:[%s153 + $0x360] sm:$0xff] %v776
        %1289 = vst [vmem:[%s153 + $0x368] sm:$0xff] %v777
        %1290 = vst [vmem:[%s153 + $0x370] sm:$0xff] %v778
        %1291 = vst [vmem:[%s153 + $0x378] sm:$0xff] %v779
        %1292 = vst [vmem:[%s153 + $0x380] sm:$0xff] %v780
        %1293 = vst [vmem:[%s153 + $0x388] sm:$0xff] %v781
        %1294 = vst [vmem:[%s153 + $0x390] sm:$0xff] %v782
        %1295 = vst [vmem:[%s153 + $0x398] sm:$0xff] %v783
        %1296 = vst [vmem:[%s153 + $0x3a0] sm:$0xff] %v784
        %1297 = vst [vmem:[%s153 + $0x3a8] sm:$0xff] %v785
        %1298 = vst [vmem:[%s153 + $0x3b0] sm:$0xff] %v786
        %1299 = vst [vmem:[%s153 + $0x3b8] sm:$0xff] %v787
        %1300 = vst [vmem:[%s153 + $0x3c0] sm:$0xff] %v788
        %1301 = vst [vmem:[%s153 + $0x3c8] sm:$0xff] %v789
        %1302 = vst [vmem:[%s153 + $0x3d0] sm:$0xff] %v790
        %1303 = vst [vmem:[%s153 + $0x3d8] sm:$0xff] %v791
        %1304 = vst [vmem:[%s153 + $0x3e0] sm:$0xff] %v792
        %1305 = vst [vmem:[%s153 + $0x3e8] sm:$0xff] %v793
        %1306 = vst [vmem:[%s153 + $0x3f0] sm:$0xff] %v794
        %1307 = vst [vmem:[%s153 + $0x3f8] sm:$0xff] %v795
        %1308 = vst [vmem:[%s153 + $0x400] sm:$0xff] %v796
        %1309 = vst [vmem:[%s153 + $0x408] sm:$0xff] %v797
        %1310 = vst [vmem:[%s153 + $0x410] sm:$0xff] %v798
        %1311 = vst [vmem:[%s153 + $0x418] sm:$0xff] %v799
        %1312 = vst [vmem:[%s153 + $0x420] sm:$0xff] %v800
        %1313 = vst [vmem:[%s153 + $0x428] sm:$0xff] %v801
        %1314 = vst [vmem:[%s153 + $0x430] sm:$0xff] %v802
        %1315 = vst [vmem:[%s153 + $0x438] sm:$0xff] %v803
        %1316 = vst [vmem:[%s153 + $0x440] sm:$0xff] %v804
        %1317 = vst [vmem:[%s153 + $0x448] sm:$0xff] %v805
        %1318 = vst [vmem:[%s153 + $0x450] sm:$0xff] %v806
        %1319 = vst [vmem:[%s153 + $0x458] sm:$0xff] %v807
        %1320 = vst [vmem:[%s153 + $0x460] sm:$0xff] %v808
        %1321 = vst [vmem:[%s153 + $0x468] sm:$0xff] %v809
        %1322 = vst [vmem:[%s153 + $0x470] sm:$0xff] %v810
        %1323 = vst [vmem:[%s153 + $0x478] sm:$0xff] %v811
        %1324 = vst [vmem:[%s153 + $0x480] sm:$0xff] %v812
        %1325 = vst [vmem:[%s153 + $0x488] sm:$0xff] %v813
        %1326 = vst [vmem:[%s153 + $0x490] sm:$0xff] %v814
        %1327 = vst [vmem:[%s153 + $0x498] sm:$0xff] %v815
        %1328 = vst [vmem:[%s153 + $0x4a0] sm:$0xff] %v816
        %1329 = vst [vmem:[%s153 + $0x4a8] sm:$0xff] %v817
        %1330 = vst [vmem:[%s153 + $0x4b0] sm:$0xff] %v818
        %1331 = vst [vmem:[%s153 + $0x4b8] sm:$0xff] %v819
        %1332 = vst [vmem:[%s153 + $0x4c0] sm:$0xff] %v820
        %1333 = vst [vmem:[%s153 + $0x4c8] sm:$0xff] %v821
        %1334 = vst [vmem:[%s153 + $0x4d0] sm:$0xff] %v822
        %1335 = vst [vmem:[%s153 + $0x4d8] sm:$0xff] %v823
        %1336 = vst [vmem:[%s153 + $0x4e0] sm:$0xff] %v824
        %1337 = vst [vmem:[%s153 + $0x4e8] sm:$0xff] %v825
        %1338 = vst [vmem:[%s153 + $0x4f0] sm:$0xff] %v826
        %1339 = vst [vmem:[%s153 + $0x4f8] sm:$0xff] %v827
        %1340 = vst [vmem:[%s153 + $0x500] sm:$0xff] %v828
        %1341 = vst [vmem:[%s153 + $0x508] sm:$0xff] %v829
        %1342 = vst [vmem:[%s153 + $0x510] sm:$0xff] %v830
        %1343 = vst [vmem:[%s153 + $0x518] sm:$0xff] %v831
        %1344 = vst [vmem:[%s153 + $0x520] sm:$0xff] %v832
        %1345 = vst [vmem:[%s153 + $0x528] sm:$0xff] %v833
        %1346 = vst [vmem:[%s153 + $0x530] sm:$0xff] %v834
        %1347 = vst [vmem:[%s153 + $0x538] sm:$0xff] %v835
        %1348 = vst [vmem:[%s153 + $0x540] sm:$0xff] %v836
        %1349 = vst [vmem:[%s153 + $0x548] sm:$0xff] %v837
        %1350 = vst [vmem:[%s153 + $0x550] sm:$0xff] %v838
        %1351 = vst [vmem:[%s153 + $0x558] sm:$0xff] %v839
        %1352 = vst [vmem:[%s153 + $0x560] sm:$0xff] %v840
        %1353 = vst [vmem:[%s153 + $0x568] sm:$0xff] %v841
        %1354 = vst [vmem:[%s153 + $0x570] sm:$0xff] %v842
        %1355 = vst [vmem:[%s153 + $0x578] sm:$0xff] %v843
        %1356 = vst [vmem:[%s153 + $0x580] sm:$0xff] %v844
        %1357 = vst [vmem:[%s153 + $0x588] sm:$0xff] %v845
        %1358 = vst [vmem:[%s153 + $0x590] sm:$0xff] %v846
        %1359 = vst [vmem:[%s153 + $0x598] sm:$0xff] %v847
        %1360 = vst [vmem:[%s153 + $0x5a0] sm:$0xff] %v848
        %1361 = vst [vmem:[%s153 + $0x5a8] sm:$0xff] %v849
        %1362 = vst [vmem:[%s153 + $0x5b0] sm:$0xff] %v850
        %1363 = vst [vmem:[%s153 + $0x5b8] sm:$0xff] %v851
        %1364 = vst [vmem:[%s153 + $0x5c0] sm:$0xff] %v852
        %1365 = vst [vmem:[%s153 + $0x5c8] sm:$0xff] %v853
        %1366 = vst [vmem:[%s153 + $0x5d0] sm:$0xff] %v854
        %1367 = vst [vmem:[%s153 + $0x5d8] sm:$0xff] %v855
        %1368 = vst [vmem:[%s153 + $0x5e0] sm:$0xff] %v856
        %1369 = vst [vmem:[%s153 + $0x5e8] sm:$0xff] %v857
        %1370 = vst [vmem:[%s153 + $0x5f0] sm:$0xff] %v858
        %1371 = vst [vmem:[%s153 + $0x5f8] sm:$0xff] %v859
        %1372 = vst [vmem:[%s153 + $0x600] sm:$0xff] %v860
        %1373 = vst [vmem:[%s153 + $0x608] sm:$0xff] %v861
        %1374 = vst [vmem:[%s153 + $0x610] sm:$0xff] %v862
        %1375 = vst [vmem:[%s153 + $0x618] sm:$0xff] %v863
        %1376 = vst [vmem:[%s153 + $0x620] sm:$0xff] %v864
        %1377 = vst [vmem:[%s153 + $0x628] sm:$0xff] %v865
        %1378 = vst [vmem:[%s153 + $0x630] sm:$0xff] %v866
        %1379 = vst [vmem:[%s153 + $0x638] sm:$0xff] %v867
        %1380 = vst [vmem:[%s153 + $0x640] sm:$0xff] %v868
        %1381 = vst [vmem:[%s153 + $0x648] sm:$0xff] %v869
        %1382 = vst [vmem:[%s153 + $0x650] sm:$0xff] %v870
        %1383 = vst [vmem:[%s153 + $0x658] sm:$0xff] %v871
        %1384 = vst [vmem:[%s153 + $0x660] sm:$0xff] %v872
        %1385 = vst [vmem:[%s153 + $0x668] sm:$0xff] %v873
        %1386 = vst [vmem:[%s153 + $0x670] sm:$0xff] %v874
        %1387 = vst [vmem:[%s153 + $0x678] sm:$0xff] %v875
        %1388 = vst [vmem:[%s153 + $0x680] sm:$0xff] %v876
        %1389 = vst [vmem:[%s153 + $0x688] sm:$0xff] %v877
        %1390 = vst [vmem:[%s153 + $0x690] sm:$0xff] %v878
        %1391 = vst [vmem:[%s153 + $0x698] sm:$0xff] %v879
        %1392 = vst [vmem:[%s153 + $0x6a0] sm:$0xff] %v880
        %1393 = vst [vmem:[%s153 + $0x6a8] sm:$0xff] %v881
        %1394 = vst [vmem:[%s153 + $0x6b0] sm:$0xff] %v882
        %1395 = vst [vmem:[%s153 + $0x6b8] sm:$0xff] %v883
        %1396 = vst [vmem:[%s153 + $0x6c0] sm:$0xff] %v884
        %1397 = vst [vmem:[%s153 + $0x6c8] sm:$0xff] %v885
        %1398 = vst [vmem:[%s153 + $0x6d0] sm:$0xff] %v886
        %1399 = vst [vmem:[%s153 + $0x6d8] sm:$0xff] %v887
        %1400 = vst [vmem:[%s153 + $0x6e0] sm:$0xff] %v888
        %1401 = vst [vmem:[%s153 + $0x6e8] sm:$0xff] %v889
        %1402 = vst [vmem:[%s153 + $0x6f0] sm:$0xff] %v890
        %1403 = vst [vmem:[%s153 + $0x6f8] sm:$0xff] %v891
        %1404 = vst [vmem:[%s153 + $0x700] sm:$0xff] %v892
        %1405 = vst [vmem:[%s153 + $0x708] sm:$0xff] %v893
        %1406 = vst [vmem:[%s153 + $0x710] sm:$0xff] %v894
        %1407 = vst [vmem:[%s153 + $0x718] sm:$0xff] %v895
        %1408 = vst [vmem:[%s153 + $0x720] sm:$0xff] %v896
        %1409 = vst [vmem:[%s153 + $0x728] sm:$0xff] %v897
        %1410 = vst [vmem:[%s153 + $0x730] sm:$0xff] %v898
        %1411 = vst [vmem:[%s153 + $0x738] sm:$0xff] %v899
        %1412 = vst [vmem:[%s153 + $0x740] sm:$0xff] %v900
        %1413 = vst [vmem:[%s153 + $0x748] sm:$0xff] %v901
        %1414 = vst [vmem:[%s153 + $0x750] sm:$0xff] %v902
        %1415 = vst [vmem:[%s153 + $0x758] sm:$0xff] %v903
        %1416 = vst [vmem:[%s153 + $0x760] sm:$0xff] %v904
        %1417 = vst [vmem:[%s153 + $0x768] sm:$0xff] %v905
        %1418 = vst [vmem:[%s153 + $0x770] sm:$0xff] %v906
        %1419 = vst [vmem:[%s153 + $0x778] sm:$0xff] %v907
        %1420 = vst [vmem:[%s153 + $0x780] sm:$0xff] %v908
        %1421 = vst [vmem:[%s153 + $0x788] sm:$0xff] %v909
        %1422 = vst [vmem:[%s153 + $0x790] sm:$0xff] %v910
        %1423 = vst [vmem:[%s153 + $0x798] sm:$0xff] %v911
        %1424 = vst [vmem:[%s153 + $0x7a0] sm:$0xff] %v912
        %1425 = vst [vmem:[%s153 + $0x7a8] sm:$0xff] %v913
        %1426 = vst [vmem:[%s153 + $0x7b0] sm:$0xff] %v914
        %1427 = vst [vmem:[%s153 + $0x7b8] sm:$0xff] %v915
        %1428 = vst [vmem:[%s153 + $0x7c0] sm:$0xff] %v916
        %1429 = vst [vmem:[%s153 + $0x7c8] sm:$0xff] %v917
        %1430 = vst [vmem:[%s153 + $0x7d0] sm:$0xff] %v918
        %1431 = vst [vmem:[%s153 + $0x7d8] sm:$0xff] %v919
        %1432 = vst [vmem:[%s153 + $0x7e0] sm:$0xff] %v920
        %1433 = vst [vmem:[%s153 + $0x7e8] sm:$0xff] %v921
        %1434 = vst [vmem:[%s153 + $0x7f0] sm:$0xff] %v922
        %1435 = vst [vmem:[%s153 + $0x7f8] sm:$0xff] %v923
        %1436 = vst [vmem:[%s153 + $0x800] sm:$0xff] %v924
        %1437 = vst [vmem:[%s153 + $0x808] sm:$0xff] %v925
        %1438 = vst [vmem:[%s153 + $0x810] sm:$0xff] %v926
        %1439 = vst [vmem:[%s153 + $0x818] sm:$0xff] %v927
        %1440 = vst [vmem:[%s153 + $0x820] sm:$0xff] %v928
        %1441 = vst [vmem:[%s153 + $0x828] sm:$0xff] %v929
        %1442 = vst [vmem:[%s153 + $0x830] sm:$0xff] %v930
        %1443 = vst [vmem:[%s153 + $0x838] sm:$0xff] %v931
        %1444 = vst [vmem:[%s153 + $0x840] sm:$0xff] %v932
        %1445 = vst [vmem:[%s153 + $0x848] sm:$0xff] %v933
        %1446 = vst [vmem:[%s153 + $0x850] sm:$0xff] %v934
        %1447 = vst [vmem:[%s153 + $0x858] sm:$0xff] %v935
        %1448 = vst [vmem:[%s153 + $0x860] sm:$0xff] %v936
        %1449 = vst [vmem:[%s153 + $0x868] sm:$0xff] %v937
        %1450 = vst [vmem:[%s153 + $0x870] sm:$0xff] %v938
        %1451 = vst [vmem:[%s153 + $0x878] sm:$0xff] %v939
        %1452 = vst [vmem:[%s153 + $0x880] sm:$0xff] %v940
        %1453 = vst [vmem:[%s153 + $0x888] sm:$0xff] %v941
        %1454 = vst [vmem:[%s153 + $0x890] sm:$0xff] %v942
        %1455 = vst [vmem:[%s153 + $0x898] sm:$0xff] %v943
        %1456 = vst [vmem:[%s153 + $0x8a0] sm:$0xff] %v944
        %1457 = vst [vmem:[%s153 + $0x8a8] sm:$0xff] %v945
        %1458 = vst [vmem:[%s153 + $0x8b0] sm:$0xff] %v946
        %1459 = vst [vmem:[%s153 + $0x8b8] sm:$0xff] %v947
        %1460 = vst [vmem:[%s153 + $0x8c0] sm:$0xff] %v948
        %1461 = vst [vmem:[%s153 + $0x8c8] sm:$0xff] %v949
        %1462 = vst [vmem:[%s153 + $0x8d0] sm:$0xff] %v950
        %1463 = vst [vmem:[%s153 + $0x8d8] sm:$0xff] %v951
        %1464 = vst [vmem:[%s153 + $0x8e0] sm:$0xff] %v952
        %1465 = vst [vmem:[%s153 + $0x8e8] sm:$0xff] %v953
        %1466 = vst [vmem:[%s153 + $0x8f0] sm:$0xff] %v954
        %1467 = vst [vmem:[%s153 + $0x8f8] sm:$0xff] %v955
        %1468 = vst [vmem:[%s153 + $0x900] sm:$0xff] %v956
        %1469 = vst [vmem:[%s153 + $0x908] sm:$0xff] %v957
        %1470 = vst [vmem:[%s153 + $0x910] sm:$0xff] %v958
        %1471 = vst [vmem:[%s153 + $0x918] sm:$0xff] %v959
        %1472 = vst [vmem:[%s153 + $0x920] sm:$0xff] %v960
        %1473 = vst [vmem:[%s153 + $0x928] sm:$0xff] %v961
        %1474 = vst [vmem:[%s153 + $0x930] sm:$0xff] %v962
        %1475 = vst [vmem:[%s153 + $0x938] sm:$0xff] %v963
        %1476 = vst [vmem:[%s153 + $0x940] sm:$0xff] %v964
        %1477 = vst [vmem:[%s153 + $0x948] sm:$0xff] %v965
        %1478 = vst [vmem:[%s153 + $0x950] sm:$0xff] %v966
        %1479 = vst [vmem:[%s153 + $0x958] sm:$0xff] %v967
        %1480 = vst [vmem:[%s153 + $0x960] sm:$0xff] %v968
        %1481 = vst [vmem:[%s153 + $0x968] sm:$0xff] %v969
        %1482 = vst [vmem:[%s153 + $0x970] sm:$0xff] %v970
        %1483 = vst [vmem:[%s153 + $0x978] sm:$0xff] %v971
        %1484 = vst [vmem:[%s153 + $0x980] sm:$0xff] %v972
        %1485 = vst [vmem:[%s153 + $0x988] sm:$0xff] %v973
        %1486 = vst [vmem:[%s153 + $0x990] sm:$0xff] %v974
        %1487 = vst [vmem:[%s153 + $0x998] sm:$0xff] %v975
        %1488 = vst [vmem:[%s153 + $0x9a0] sm:$0xff] %v976
        %1489 = vst [vmem:[%s153 + $0x9a8] sm:$0xff] %v977
        %1490 = vst [vmem:[%s153 + $0x9b0] sm:$0xff] %v978
        %1491 = vst [vmem:[%s153 + $0x9b8] sm:$0xff] %v979
        %1492 = vst [vmem:[%s153 + $0x9c0] sm:$0xff] %v980
        %1493 = vst [vmem:[%s153 + $0x9c8] sm:$0xff] %v981
        %1494 = vst [vmem:[%s153 + $0x9d0] sm:$0xff] %v982
        %1495 = vst [vmem:[%s153 + $0x9d8] sm:$0xff] %v983
        %1496 = vst [vmem:[%s153 + $0x9e0] sm:$0xff] %v984
        %1497 = vst [vmem:[%s153 + $0x9e8] sm:$0xff] %v985
        %1498 = vst [vmem:[%s153 + $0x9f0] sm:$0xff] %v986
        %1499 = vst [vmem:[%s153 + $0x9f8] sm:$0xff] %v987
        %1500 = vst [vmem:[%s153 + $0xa00] sm:$0xff] %v988
        %1501 = vst [vmem:[%s153 + $0xa08] sm:$0xff] %v989
        %1502 = vst [vmem:[%s153 + $0xa10] sm:$0xff] %v990
        %1503 = vst [vmem:[%s153 + $0xa18] sm:$0xff] %v991
        %1504 = vst [vmem:[%s153 + $0xa20] sm:$0xff] %v992
        %1505 = vst [vmem:[%s153 + $0xa28] sm:$0xff] %v993
        %1506 = vst [vmem:[%s153 + $0xa30] sm:$0xff] %v994
        %1507 = vst [vmem:[%s153 + $0xa38] sm:$0xff] %v995
        %1508 = vst [vmem:[%s153 + $0xa40] sm:$0xff] %v996
        %1509 = vst [vmem:[%s153 + $0xa48] sm:$0xff] %v997
        %1510 = vst [vmem:[%s153 + $0xa50] sm:$0xff] %v998
        %1511 = vst [vmem:[%s153 + $0xa58] sm:$0xff] %v999
        %1512 = vst [vmem:[%s153 + $0xa60] sm:$0xff] %v1000
        %1513 = vst [vmem:[%s153 + $0xa68] sm:$0xff] %v1001
        %1514 = vst [vmem:[%s153 + $0xa70] sm:$0xff] %v1002
        %1515 = vst [vmem:[%s153 + $0xa78] sm:$0xff] %v1003
        %1516 = vst [vmem:[%s153 + $0xa80] sm:$0xff] %v1004
        %1517 = vst [vmem:[%s153 + $0xa88] sm:$0xff] %v1005
        %1518 = vst [vmem:[%s153 + $0xa90] sm:$0xff] %v1006
        %1519 = vst [vmem:[%s153 + $0xa98] sm:$0xff] %v1007
        %1520 = vst [vmem:[%s153 + $0xaa0] sm:$0xff] %v1008
        %1521 = vst [vmem:[%s153 + $0xaa8] sm:$0xff] %v1009
        %1522 = vst [vmem:[%s153 + $0xab0] sm:$0xff] %v1010
        %1523 = vst [vmem:[%s153 + $0xab8] sm:$0xff] %v1011
        %1524 = vst [vmem:[%s153 + $0xac0] sm:$0xff] %v1012
        %1525 = vst [vmem:[%s153 + $0xac8] sm:$0xff] %v1013
        %1526 = vst [vmem:[%s153 + $0xad0] sm:$0xff] %v1014
        %1527 = vst [vmem:[%s153 + $0xad8] sm:$0xff] %v1015
        %1528 = vst [vmem:[%s153 + $0xae0] sm:$0xff] %v1016
        %1529 = vst [vmem:[%s153 + $0xae8] sm:$0xff] %v1017
        %1530 = vst [vmem:[%s153 + $0xaf0] sm:$0xff] %v1018
        %1531 = vst [vmem:[%s153 + $0xaf8] sm:$0xff] %v1019
        %1532 = vst [vmem:[%s153 + $0xb00] sm:$0xff] %v1020
        %1533 = vst [vmem:[%s153 + $0xb08] sm:$0xff] %v1021
        %1534 = vst [vmem:[%s153 + $0xb10] sm:$0xff] %v1022
        %1535 = vst [vmem:[%s153 + $0xb18] sm:$0xff] %v1023
        %1536 = vst [vmem:[%s153 + $0xb20] sm:$0xff] %v1024
        %1537 = vst [vmem:[%s153 + $0xb28] sm:$0xff] %v1025
        %1538 = vst [vmem:[%s153 + $0xb30] sm:$0xff] %v1026
        %1539 = vst [vmem:[%s153 + $0xb38] sm:$0xff] %v1027
        %1540 = vst [vmem:[%s153 + $0xb40] sm:$0xff] %v1028
        %1541 = vst [vmem:[%s153 + $0xb48] sm:$0xff] %v1029
        %1542 = vst [vmem:[%s153 + $0xb50] sm:$0xff] %v1030
        %1543 = vst [vmem:[%s153 + $0xb58] sm:$0xff] %v1031
        %1544 = vst [vmem:[%s153 + $0xb60] sm:$0xff] %v1032
        %1545 = vst [vmem:[%s153 + $0xb68] sm:$0xff] %v1033
        %1546 = vst [vmem:[%s153 + $0xb70] sm:$0xff] %v1034
        %1547 = vst [vmem:[%s153 + $0xb78] sm:$0xff] %v1035
        %1548 = vst [vmem:[%s153 + $0xb80] sm:$0xff] %v1036
        %1549 = vst [vmem:[%s153 + $0xb88] sm:$0xff] %v1037
        %1550 = vst [vmem:[%s153 + $0xb90] sm:$0xff] %v1038
        %1551 = vst [vmem:[%s153 + $0xb98] sm:$0xff] %v1039
        %1552 = vst [vmem:[%s153 + $0xba0] sm:$0xff] %v1040
        %1553 = vst [vmem:[%s153 + $0xba8] sm:$0xff] %v1041
        %1554 = vst [vmem:[%s153 + $0xbb0] sm:$0xff] %v1042
        %1555 = vst [vmem:[%s153 + $0xbb8] sm:$0xff] %v1043
        %1556 = vst [vmem:[%s153 + $0xbc0] sm:$0xff] %v1044
        %1557 = vst [vmem:[%s153 + $0xbc8] sm:$0xff] %v1045
        %1558 = vst [vmem:[%s153 + $0xbd0] sm:$0xff] %v1046
        %1559 = vst [vmem:[%s153 + $0xbd8] sm:$0xff] %v1047
        %1560 = vst [vmem:[%s153 + $0xbe0] sm:$0xff] %v1048
        %1561 = vst [vmem:[%s153 + $0xbe8] sm:$0xff] %v1049
        %1562 = vst [vmem:[%s153 + $0xbf0] sm:$0xff] %v1050
        %1563 = vst [vmem:[%s153 + $0xbf8] sm:$0xff] %v1051
        %1564 = vst [vmem:[%s153 + $0xc00] sm:$0xff] %v1052
        %1565 = vst [vmem:[%s153 + $0xc08] sm:$0xff] %v1053
        %1566 = vst [vmem:[%s153 + $0xc10] sm:$0xff] %v1054
        %1567 = vst [vmem:[%s153 + $0xc18] sm:$0xff] %v1055
        %1568 = vst [vmem:[%s153 + $0xc20] sm:$0xff] %v1056
        %1569 = vst [vmem:[%s153 + $0xc28] sm:$0xff] %v1057
        %1570 = vst [vmem:[%s153 + $0xc30] sm:$0xff] %v1058
        %1571 = vst [vmem:[%s153 + $0xc38] sm:$0xff] %v1059
        %1572 = vst [vmem:[%s153 + $0xc40] sm:$0xff] %v1060
        %1573 = vst [vmem:[%s153 + $0xc48] sm:$0xff] %v1061
        %1574 = vst [vmem:[%s153 + $0xc50] sm:$0xff] %v1062
        %1575 = vst [vmem:[%s153 + $0xc58] sm:$0xff] %v1063
        %1576 = vst [vmem:[%s153 + $0xc60] sm:$0xff] %v1064
        %1577 = vst [vmem:[%s153 + $0xc68] sm:$0xff] %v1065
        %1578 = vst [vmem:[%s153 + $0xc70] sm:$0xff] %v1066
        %1579 = vst [vmem:[%s153 + $0xc78] sm:$0xff] %v1067
        %1580 = vst [vmem:[%s153 + $0xc80] sm:$0xff] %v1068
        %1581 = vst [vmem:[%s153 + $0xc88] sm:$0xff] %v1069
        %1582 = vst [vmem:[%s153 + $0xc90] sm:$0xff] %v1070
        %1583 = vst [vmem:[%s153 + $0xc98] sm:$0xff] %v1071
        %1584 = vst [vmem:[%s153 + $0xca0] sm:$0xff] %v1072
        %1585 = vst [vmem:[%s153 + $0xca8] sm:$0xff] %v1073
        %1586 = vst [vmem:[%s153 + $0xcb0] sm:$0xff] %v1074
        %1587 = vst [vmem:[%s153 + $0xcb8] sm:$0xff] %v1075
        %1588 = vst [vmem:[%s153 + $0xcc0] sm:$0xff] %v1076
        %1589 = vst [vmem:[%s153 + $0xcc8] sm:$0xff] %v1077
        %1590 = vst [vmem:[%s153 + $0xcd0] sm:$0xff] %v1078
        %1591 = vst [vmem:[%s153 + $0xcd8] sm:$0xff] %v1079
        %1592 = vst [vmem:[%s153 + $0xce0] sm:$0xff] %v1080
        %1593 = vst [vmem:[%s153 + $0xce8] sm:$0xff] %v1081
        %1594 = vst [vmem:[%s153 + $0xcf0] sm:$0xff] %v1082
        %1595 = vst [vmem:[%s153 + $0xcf8] sm:$0xff] %v1083
        %1596 = vst [vmem:[%s153 + $0xd00] sm:$0xff] %v1084
        %1597 = vst [vmem:[%s153 + $0xd08] sm:$0xff] %v1085
        %1598 = vst [vmem:[%s153 + $0xd10] sm:$0xff] %v1086
        %1599 = vst [vmem:[%s153 + $0xd18] sm:$0xff] %v1087
        %1600 = vst [vmem:[%s153 + $0xd20] sm:$0xff] %v1088
        %1601 = vst [vmem:[%s153 + $0xd28] sm:$0xff] %v1089
        %1602 = vst [vmem:[%s153 + $0xd30] sm:$0xff] %v1090
        %1603 = vst [vmem:[%s153 + $0xd38] sm:$0xff] %v1091
        %1604 = vst [vmem:[%s153 + $0xd40] sm:$0xff] %v1092
        %1605 = vst [vmem:[%s153 + $0xd48] sm:$0xff] %v1093
        %1606 = vst [vmem:[%s153 + $0xd50] sm:$0xff] %v1094
        %1607 = vst [vmem:[%s153 + $0xd58] sm:$0xff] %v1095
        %1608 = vst [vmem:[%s153 + $0xd60] sm:$0xff] %v1096
        %1609 = vst [vmem:[%s153 + $0xd68] sm:$0xff] %v1097
        %1610 = vst [vmem:[%s153 + $0xd70] sm:$0xff] %v1098
        %1611 = vst [vmem:[%s153 + $0xd78] sm:$0xff] %v1099
        %1612 = vst [vmem:[%s153 + $0xd80] sm:$0xff] %v1100
        %1613 = vst [vmem:[%s153 + $0xd88] sm:$0xff] %v1101
        %1614 = vst [vmem:[%s153 + $0xd90] sm:$0xff] %v1102
        %1615 = vst [vmem:[%s153 + $0xd98] sm:$0xff] %v1103
        %1616 = vst [vmem:[%s153 + $0xda0] sm:$0xff] %v1104
        %1617 = vst [vmem:[%s153 + $0xda8] sm:$0xff] %v1105
        %1618 = vst [vmem:[%s153 + $0xdb0] sm:$0xff] %v1106
        %1619 = vst [vmem:[%s153 + $0xdb8] sm:$0xff] %v1107
        %1620 = vst [vmem:[%s153 + $0xdc0] sm:$0xff] %v1108
        %1621 = vst [vmem:[%s153 + $0xdc8] sm:$0xff] %v1109
        %1622 = vst [vmem:[%s153 + $0xdd0] sm:$0xff] %v1110
        %1623 = vst [vmem:[%s153 + $0xdd8] sm:$0xff] %v1111
        %1624 = vst [vmem:[%s153 + $0xde0] sm:$0xff] %v1112
        %1625 = vst [vmem:[%s153 + $0xde8] sm:$0xff] %v1113
        %1626 = vst [vmem:[%s153 + $0xdf0] sm:$0xff] %v1114
        %1627 = vst [vmem:[%s153 + $0xdf8] sm:$0xff] %v1115
        %1628 = vst [vmem:[%s153 + $0xe00] sm:$0xff] %v1116
        %1629 = vst [vmem:[%s153 + $0xe08] sm:$0xff] %v1117
        %1630 = vst [vmem:[%s153 + $0xe10] sm:$0xff] %v1118
        %1631 = vst [vmem:[%s153 + $0xe18] sm:$0xff] %v1119
        %1632 = vst [vmem:[%s153 + $0xe20] sm:$0xff] %v1120
        %1633 = vst [vmem:[%s153 + $0xe28] sm:$0xff] %v1121
        %1634 = vst [vmem:[%s153 + $0xe30] sm:$0xff] %v1122
        %1635 = vst [vmem:[%s153 + $0xe38] sm:$0xff] %v1123
        %1636 = vst [vmem:[%s153 + $0xe40] sm:$0xff] %v1124
        %1637 = vst [vmem:[%s153 + $0xe48] sm:$0xff] %v1125
        %1638 = vst [vmem:[%s153 + $0xe50] sm:$0xff] %v1126
        %1639 = vst [vmem:[%s153 + $0xe58] sm:$0xff] %v1127
        %1640 = vst [vmem:[%s153 + $0xe60] sm:$0xff] %v1128
        %1641 = vst [vmem:[%s153 + $0xe68] sm:$0xff] %v1129
        %1642 = vst [vmem:[%s153 + $0xe70] sm:$0xff] %v1130
        %1643 = vst [vmem:[%s153 + $0xe78] sm:$0xff] %v1131
        %1644 = vst [vmem:[%s153 + $0xe80] sm:$0xff] %v1132
        %1645 = vst [vmem:[%s153 + $0xe88] sm:$0xff] %v1133
        %1646 = vst [vmem:[%s153 + $0xe90] sm:$0xff] %v1134
        %1647 = vst [vmem:[%s153 + $0xe98] sm:$0xff] %v1135
        %1648 = vst [vmem:[%s153 + $0xea0] sm:$0xff] %v1136
        %1649 = vst [vmem:[%s153 + $0xea8] sm:$0xff] %v1137
        %1650 = vst [vmem:[%s153 + $0xeb0] sm:$0xff] %v1138
        %1651 = vst [vmem:[%s153 + $0xeb8] sm:$0xff] %v1139
        %1652 = vst [vmem:[%s153 + $0xec0] sm:$0xff] %v1140
        %1653 = vst [vmem:[%s153 + $0xec8] sm:$0xff] %v1141
        %1654 = vst [vmem:[%s153 + $0xed0] sm:$0xff] %v1142
        %1655 = vst [vmem:[%s153 + $0xed8] sm:$0xff] %v1143
        %1656 = vst [vmem:[%s153 + $0xee0] sm:$0xff] %v1144
        %1657 = vst [vmem:[%s153 + $0xee8] sm:$0xff] %v1145
        %1658 = vst [vmem:[%s153 + $0xef0] sm:$0xff] %v1146
        %1659 = vst [vmem:[%s153 + $0xef8] sm:$0xff] %v1147
        %1660 = vst [vmem:[%s153 + $0xf00] sm:$0xff] %v1148
        %1661 = vst [vmem:[%s153 + $0xf08] sm:$0xff] %v1149
        %1662 = vst [vmem:[%s153 + $0xf10] sm:$0xff] %v1150
        %1663 = vst [vmem:[%s153 + $0xf18] sm:$0xff] %v1151
        %1664 = vst [vmem:[%s153 + $0xf20] sm:$0xff] %v1152
        %1665 = vst [vmem:[%s153 + $0xf28] sm:$0xff] %v1153
        %1666 = vst [vmem:[%s153 + $0xf30] sm:$0xff] %v1154
        %1667 = vst [vmem:[%s153 + $0xf38] sm:$0xff] %v1155
        %1668 = vst [vmem:[%s153 + $0xf40] sm:$0xff] %v1156
        %1669 = vst [vmem:[%s153 + $0xf48] sm:$0xff] %v1157
        %1670 = vst [vmem:[%s153 + $0xf50] sm:$0xff] %v1158
        %1671 = vst [vmem:[%s153 + $0xf58] sm:$0xff] %v1159
        %1672 = vst [vmem:[%s153 + $0xf60] sm:$0xff] %v1160
        %1673 = vst [vmem:[%s153 + $0xf68] sm:$0xff] %v1161
        %1674 = vst [vmem:[%s153 + $0xf70] sm:$0xff] %v1162
        %1675 = vst [vmem:[%s153 + $0xf78] sm:$0xff] %v1163
        %1676 = vst [vmem:[%s153 + $0xf80] sm:$0xff] %v1164
        %1677 = vst [vmem:[%s153 + $0xf88] sm:$0xff] %v1165
        %1678 = vst [vmem:[%s153 + $0xf90] sm:$0xff] %v1166
        %1679 = vst [vmem:[%s153 + $0xf98] sm:$0xff] %v1167
        %1680 = vst [vmem:[%s153 + $0xfa0] sm:$0xff] %v1168
        %1681 = vst [vmem:[%s153 + $0xfa8] sm:$0xff] %v1169
        %1682 = vst [vmem:[%s153 + $0xfb0] sm:$0xff] %v1170
        %1683 = vst [vmem:[%s153 + $0xfb8] sm:$0xff] %v1171
        %1684 = vst [vmem:[%s153 + $0xfc0] sm:$0xff] %v1172
        %1685 = vst [vmem:[%s153 + $0xfc8] sm:$0xff] %v1173
        %1686 = vst [vmem:[%s153 + $0xfd0] sm:$0xff] %v1174
        %1687 = vst [vmem:[%s153 + $0xfd8] sm:$0xff] %v1175
        %1688 = vst [vmem:[%s153 + $0xfe0] sm:$0xff] %v1176
        %1689 = vst [vmem:[%s153 + $0xfe8] sm:$0xff] %v1177
        %1690 = vst [vmem:[%s153 + $0xff0] sm:$0xff] %v1178
        %1691 = vst [vmem:[%s153 + $0xff8] sm:$0xff] %v1179
        %s1692 = sand.u32 %s68, 1
        %s1693 = scalar_lea.sflag [#allocation4], %s1692
        %s1694 = sand.u32 %s68, 1
        %s1695 = smul.addr %s1694, 4096
        %s1696 = scalar_lea.vmem [#allocation5], %s1695
        // Predicated region
        $region29: #{tpu_custom_call.1} parent=23 // pred_check
          %p1697 = pneg %p78
        $region30: #{tpu_custom_call.1} parent=23 // pred_check_branch
          %1699 = sbr.rel (%p1697) target = $region32
        $region31: #{tpu_custom_call.1} parent=23 // pred_region
          %s1700 = smul.u32 512, %s22
          %1702 = vsyncadd %s1693, 0
          %s1703 = sadd.s32 %s23, %s1700
          %s1704 = smul.addr %s1703, 8
          %s1705 = scalar_lea.hbm %s1, %s1704
          %s1706 = sshll.u32 %s1696, 4
          %s1707 = int_to_ptr.vmem [resolvable:$true] %s1706
          %s1708 = sshll.u32 %s1705, 4
          %s1709 = int_to_ptr.hbm [resolvable:$true] %s1708
          %1714 = dma.vmem_to_hbm [thread:$0]  %s1707, 65536, %s1709, %s1693, 128, 128, 8
        $region32: #{tpu_custom_call.1} parent=23 // pred_fallthru
          _
      $region24: #{tpu_custom_call.1} parent=5 // pred_fallthru
        _
      %p1715 = scmp.le.s32.totalorder 2, %s13
      // Predicated region
      $region33: #{tpu_custom_call.1} parent=5 // pred_check
        %p1716 = pneg %p1715
      $region34: #{tpu_custom_call.1} parent=5 // pred_check_branch
        %1718 = sbr.rel (%p1716) target = $region36
      $region35: #{tpu_custom_call.1} parent=5 // pred_region
        %s1719 = ssub.s32 %s13, 2
        // Predicated region
        $region37: #{tpu_custom_call.1} parent=35 // pred_check
          %p1720 = pneg %p84
        $region38: #{tpu_custom_call.1} parent=35 // pred_check_branch
          %1722 = sbr.rel (%p1720) target = $region40
        $region39: #{tpu_custom_call.1} parent=35 // pred_region
          %s1723 = sand.u32 %s69, 1
          %s1724 = scalar_lea.sflag [#allocation4], %s1723
          %s1725 = sand.u32 %s69, 1
          %s1726 = smul.addr %s1725, 4096
          %s1727 = scalar_lea.vmem [#allocation5], %s1726
          %1729 = dma.done %s1724, 65536
        $region40: #{tpu_custom_call.1} parent=35 // pred_fallthru
          _
      $region36: #{tpu_custom_call.1} parent=5 // pred_fallthru
        _
    $region6: #{tpu_custom_call.1} parent=1 // loop_footer
      %s17 = sadd.s32 1, %s13
    $region7: #{tpu_custom_call.1} parent=1 // loop_footer_branch
      %12 = sbr.rel target = $region3
    $region8: #{tpu_custom_call.1} parent=1 // loop_exit
      _
    %1730 = vsyncpa [#allocation3], 1
    %s1731 = scalar_lea.sflag [#allocation3], 1
    %1732 = vsyncpa %s1731, 1
    %1733 = vsyncpa [#allocation4], 1
    %s1734 = scalar_lea.sflag [#allocation4], 1
    %1735 = vsyncpa %s1734, 1

</llo_original>
